<compile_context>
chip_gen: v7x
topology: tpu7x:2x2x1
jax: 0.10.0
libtpu: 0.0.40
codegen_flags: <defaults>
</compile_context>

<pallas_src>
import functools

import jax
import jax.numpy as jnp
from jax import lax
from jax.experimental import pallas as pl
from jax.experimental.pallas import tpu as pltpu


def conv2d_kernel(x_ref, w_ref, b_ref, o_ref, xbuf_ref, im2col_ref,
                  *, N, Cin, Cout, H, W, KH, KW, S):
    """3x3 / pad=1 / stride=1 conv as a single im2col matmul.

    x_ref:      (N, Cin, H*W)          raw input, spatial flattened (lane-dense)
    w_ref:      (Cout, KH*KW*Cin)      flattened weights, column order (kh,kw,cin)
    b_ref:      (Cout, 1)              bias
    o_ref:      (N, Cout, H*W)         output, spatial flattened (lane-dense)
    xbuf_ref:   (N, Cin, Lbuf) VMEM    zero halo + image at lane offset S
    im2col_ref: (KH*KW*Cin, N*H*W) VMEM
    """
    HW = H * W

    # (1) In-kernel padding: zero the row buffer once, drop both images in at a
    #     vreg-aligned lane offset (S is a multiple of 128 -> unmasked stores).
    xbuf_ref[...] = jnp.zeros_like(xbuf_ref)
    xbuf_ref[:, :, S:S + HW] = x_ref[...]

    # (2) Width-edge masks over the flattened spatial (lane) axis, hoisted out
    #     of all loops.  Flattening with stride W makes a left/right neighbour
    #     of an edge pixel wrap to the adjacent row; these selects zero it.
    col = lax.broadcasted_iota(jnp.int32, (Cin, HW), 1) % W
    not_left = col != 0            # taps with dx = -1 must be 0 at w == 0
    not_right = col != (W - 1)     # taps with dx = +1 must be 0 at w == W-1

    # (3) Build the (KH*KW*Cin, N*HW) im2col tile.  Each tap is a single
    #     contiguous lane slice of the padded row buffer (height halo is zeros),
    #     written as one sublane block per image (lane offsets 0 / HW are
    #     128-aligned).
    for kh in range(KH):
        for kw in range(KW):
            t = kh * KW + kw
            off = S + (kh - 1) * W + (kw - 1)
            for n in range(N):
                tap = xbuf_ref[n, :, off:off + HW]          # (Cin, HW) lane slice
                if kw == 0:
                    tap = jnp.where(not_left, tap, 0.0)
                elif kw == KW - 1:
                    tap = jnp.where(not_right, tap, 0.0)
                im2col_ref[t * Cin:(t + 1) * Cin, n * HW:(n + 1) * HW] = tap

    # (4) One MXU matmul for all taps and both images (K = 36, lanes = 512),
    #     full-f32 precision, bias folded into the epilogue add.
    out = jnp.dot(w_ref[...], im2col_ref[...],
                  preferred_element_type=jnp.float32,
                  precision=lax.Precision.HIGHEST) + b_ref[...]

    # (5) Lane-dense, 128-aligned, unmasked per-image stores.
    for n in range(N):
        o_ref[n] = out[:, n * HW:(n + 1) * HW].astype(o_ref.dtype)


@functools.partial(jax.jit, static_argnames=("padding",))
def conv2d_pallas(x_nchw, w_oihw, b, *, padding=1):
    N, Cin, H, W = x_nchw.shape
    Cout, Cin_w, KH, KW = w_oihw.shape
    assert Cin == Cin_w
    # This kernel is specialized to the instantiated layer: 3x3, pad=1, stride=1.
    assert KH == 3 and KW == 3 and padding == 1, "kernel specialized to 3x3/pad=1"

    HW = H * W
    # Image start lane inside the padded row buffer: vreg-aligned and >= W + 1 so
    # the top-halo tap slices never underflow.
    S = max(128, ((W + 1 + 127) // 128) * 128)
    Lbuf = ((S + HW + W + 1 + 127) // 128) * 128
    # Static bounds check: VMEM reads have no runtime bounds check, so assert
    # that every tap slice [S + dy*W + dx, ... + HW) stays inside [0, Lbuf).
    assert S - W - 1 >= 0 and S + HW + W + 1 <= Lbuf

    # Host-side layout plumbing (all tiny / free):
    x_flat = x_nchw.reshape(N, Cin, HW)                       # contiguous, free
    # (O, I, KH, KW) -> (O, KH, KW, I) -> (O, KH*KW*I): column = (kh*KW+kw)*Cin + c,
    # matching the im2col row order.  ~1 KB, negligible.
    w2d = jnp.transpose(w_oihw, (0, 2, 3, 1)).reshape(Cout, KH * KW * Cin)
    b2 = b.reshape(Cout, 1).astype(jnp.float32)

    kernel = functools.partial(conv2d_kernel, N=N, Cin=Cin, Cout=Cout,
                               H=H, W=W, KH=KH, KW=KW, S=S)

    out_flat = pl.pallas_call(
        kernel,
        out_shape=jax.ShapeDtypeStruct((N, Cout, HW), x_nchw.dtype),
        # No grid: single step, everything resident in VMEM once (~120 KB).
        in_specs=[
            pl.BlockSpec(memory_space=pltpu.MemorySpace.VMEM),
            pl.BlockSpec(memory_space=pltpu.MemorySpace.VMEM),
            pl.BlockSpec(memory_space=pltpu.MemorySpace.VMEM),
        ],
        out_specs=pl.BlockSpec(memory_space=pltpu.MemorySpace.VMEM),
        scratch_shapes=[
            pltpu.VMEM((N, Cin, Lbuf), jnp.float32),           # padded row buffer
            pltpu.VMEM((KH * KW * Cin, N * HW), jnp.float32),  # im2col tile
        ],
    )(x_flat, w2d, b2)

    # Only epilogue: contiguous reshape back to NCHW (no data movement).
    return out_flat.reshape(N, Cout, H, W)


def reference_conv(x_nchw, w_oihw, b, *, padding=1):
    out = lax.conv_general_dilated(
        x_nchw, w_oihw, window_strides=(1, 1),
        padding=[(padding, padding), (padding, padding)],
        dimension_numbers=("NCHW", "OIHW", "NCHW"),
        precision=lax.Precision.HIGHEST)
    return out + b.reshape(1, -1, 1, 1)


if __name__ == "__main__":
    key = jax.random.PRNGKey(0)
    kx, kw, kb = jax.random.split(key, 3)

    N, Cin, H, W = 2, 4, 16, 16
    Cout, KH, KW = 8, 3, 3

    x = jax.random.normal(kx, (N, Cin, H, W), dtype=jnp.float32)
    # Deterministic parameter init (Conv2d-style fan-in scaling).
    fan_in = Cin * KH * KW
    weight = jax.random.normal(kw, (Cout, Cin, KH, KW), dtype=jnp.float32) / jnp.sqrt(fan_in)
    bias = jax.random.normal(kb, (Cout,), dtype=jnp.float32) * 0.1

    out = conv2d_pallas(x, weight, bias, padding=1)
    out = jax.block_until_ready(out)

    ref = jax.block_until_ready(reference_conv(x, weight, bias, padding=1))
    assert out.shape == (N, Cout, H, W)
    assert jnp.allclose(out, ref, atol=1e-4, rtol=1e-4), "mismatch vs lax reference"

    print("KERNEL_OK")
</pallas_src>

<mosaic_0001>
module attributes {stable_mosaic.version = 11 : i64} {
  func.func @conv2d_kernel(%arg0: memref<2x4x256xf32, #tpu.memory_space<vmem>>, %arg1: memref<8x36xf32, #tpu.memory_space<vmem>>, %arg2: memref<8x1xf32, #tpu.memory_space<vmem>>, %arg3: memref<2x8x256xf32, #tpu.memory_space<vmem>>, %arg4: memref<2x4x512xf32, #tpu.memory_space<vmem>>, %arg5: memref<36x512xf32, #tpu.memory_space<vmem>>) attributes {dimension_semantics = [], scalar_prefetch = 0 : i64, scratch_operands = 2 : i64, tpu.core_type = #tpu.core_type<tc>} {
    %cst = arith.constant 0.000000e+00 : f32
    %0 = vector.broadcast %cst : f32 to vector<2x4x512xf32>
    %c0 = arith.constant 0 : index
    %c0_0 = arith.constant 0 : index
    %c0_1 = arith.constant 0 : index
    %1 = vector.load %arg4[%c0, %c0_0, %c0_1] : memref<2x4x512xf32, #tpu.memory_space<vmem>>, vector<2x4x512xf32>
    tpu.vector_store %arg4[%c0, %c0_0, %c0_1], %0 {strides = array<i32>} : memref<2x4x512xf32, #tpu.memory_space<vmem>>, vector<2x4x512xf32>,
    %c0_2 = arith.constant 0 : index
    %c0_3 = arith.constant 0 : index
    %c0_4 = arith.constant 0 : index
    %2 = vector.load %arg0[%c0_2, %c0_3, %c0_4] : memref<2x4x256xf32, #tpu.memory_space<vmem>>, vector<2x4x256xf32>
    %c0_5 = arith.constant 0 : index
    %c0_6 = arith.constant 0 : index
    %c128 = arith.constant 128 : index
    %3 = vector.load %arg4[%c0_5, %c0_6, %c128] : memref<2x4x512xf32, #tpu.memory_space<vmem>>, vector<2x4x256xf32>
    tpu.vector_store %arg4[%c0_5, %c0_6, %c128], %2 {strides = array<i32>} : memref<2x4x512xf32, #tpu.memory_space<vmem>>, vector<2x4x256xf32>,
    %4 = tpu.iota {dimensions = array<i32: 1>} : vector<4x256xi32>
    %c16_i32 = arith.constant 16 : i32
    %c0_i32 = arith.constant 0 : i32
    %5 = arith.cmpi eq, %c16_i32, %c0_i32 : i32
    %c1_i32 = arith.constant 1 : i32
    %6 = arith.select %5, %c1_i32, %c16_i32 : i32
    %7 = vector.broadcast %6 : i32 to vector<4x256xi32>
    %8 = arith.remsi %4, %7 : vector<4x256xi32>
    %c0_i32_7 = arith.constant 0 : i32
    %9 = vector.broadcast %c0_i32_7 : i32 to vector<4x256xi32>
    %10 = arith.cmpi ne, %8, %9 : vector<4x256xi32>
    %c0_i32_8 = arith.constant 0 : i32
    %11 = vector.broadcast %c0_i32_8 : i32 to vector<4x256xi32>
    %12 = arith.cmpi slt, %8, %11 : vector<4x256xi32>
    %c0_i32_9 = arith.constant 0 : i32
    %13 = arith.cmpi slt, %6, %c0_i32_9 : i32
    %14 = vector.broadcast %13 : i1 to vector<4x256xi1>
    %15 = vector.broadcast %14 : vector<4x256xi1> to vector<4x256xi1>
    %16 = arith.xori %12, %15 : vector<4x256xi1>
    %17 = arith.andi %16, %10 : vector<4x256xi1>
    %18 = vector.broadcast %6 : i32 to vector<4x256xi32>
    %19 = arith.addi %8, %18 : vector<4x256xi32>
    %20 = arith.select %17, %19, %8 : vector<4x256xi1>, vector<4x256xi32>
    %c0_i32_10 = arith.constant 0 : i32
    %21 = vector.broadcast %c0_i32_10 : i32 to vector<4x256xi32>
    %22 = arith.cmpi ne, %20, %21 : vector<4x256xi32>
    %c15_i32 = arith.constant 15 : i32
    %23 = vector.broadcast %c15_i32 : i32 to vector<4x256xi32>
    %24 = arith.cmpi ne, %20, %23 : vector<4x256xi32>
    %c0_11 = arith.constant 0 : index
    %c0_12 = arith.constant 0 : index
    %c111 = arith.constant 111 : index
    %25 = vector.load %arg4[%c0_11, %c0_12, %c111] : memref<2x4x512xf32, #tpu.memory_space<vmem>>, vector<1x4x256xf32>
    %26 = vector.shape_cast %25 : vector<1x4x256xf32> to vector<4x256xf32>
    %cst_13 = arith.constant 0.000000e+00 : f32
    %27 = vector.broadcast %cst_13 : f32 to vector<4x256xf32>
    %28 = arith.select %22, %26, %27 : vector<4x256xi1>, vector<4x256xf32>
    %c0_14 = arith.constant 0 : index
    %c0_15 = arith.constant 0 : index
    %29 = vector.load %arg5[%c0_14, %c0_15] : memref<36x512xf32, #tpu.memory_space<vmem>>, vector<4x256xf32>
    tpu.vector_store %arg5[%c0_14, %c0_15], %28 {strides = array<i32>} : memref<36x512xf32, #tpu.memory_space<vmem>>, vector<4x256xf32>,
    %c1 = arith.constant 1 : index
    %c0_16 = arith.constant 0 : index
    %c111_17 = arith.constant 111 : index
    %30 = vector.load %arg4[%c1, %c0_16, %c111_17] : memref<2x4x512xf32, #tpu.memory_space<vmem>>, vector<1x4x256xf32>
    %31 = vector.shape_cast %30 : vector<1x4x256xf32> to vector<4x256xf32>
    %cst_18 = arith.constant 0.000000e+00 : f32
    %32 = vector.broadcast %cst_18 : f32 to vector<4x256xf32>
    %33 = arith.select %22, %31, %32 : vector<4x256xi1>, vector<4x256xf32>
    %c0_19 = arith.constant 0 : index
    %c256 = arith.constant 256 : index
    %34 = vector.load %arg5[%c0_19, %c256] : memref<36x512xf32, #tpu.memory_space<vmem>>, vector<4x256xf32>
    tpu.vector_store %arg5[%c0_19, %c256], %33 {strides = array<i32>} : memref<36x512xf32, #tpu.memory_space<vmem>>, vector<4x256xf32>,
    %c0_20 = arith.constant 0 : index
    %c0_21 = arith.constant 0 : index
    %c112 = arith.constant 112 : index
    %35 = vector.load %arg4[%c0_20, %c0_21, %c112] : memref<2x4x512xf32, #tpu.memory_space<vmem>>, vector<1x4x256xf32>
    %36 = vector.shape_cast %35 : vector<1x4x256xf32> to vector<4x256xf32>
    %c4 = arith.constant 4 : index
    %c0_22 = arith.constant 0 : index
    %37 = vector.load %arg5[%c4, %c0_22] : memref<36x512xf32, #tpu.memory_space<vmem>>, vector<4x256xf32>
    tpu.vector_store %arg5[%c4, %c0_22], %36 {strides = array<i32>} : memref<36x512xf32, #tpu.memory_space<vmem>>, vector<4x256xf32>,
    %c1_23 = arith.constant 1 : index
    %c0_24 = arith.constant 0 : index
    %c112_25 = arith.constant 112 : index
    %38 = vector.load %arg4[%c1_23, %c0_24, %c112_25] : memref<2x4x512xf32, #tpu.memory_space<vmem>>, vector<1x4x256xf32>
    %39 = vector.shape_cast %38 : vector<1x4x256xf32> to vector<4x256xf32>
    %c4_26 = arith.constant 4 : index
    %c256_27 = arith.constant 256 : index
    %40 = vector.load %arg5[%c4_26, %c256_27] : memref<36x512xf32, #tpu.memory_space<vmem>>, vector<4x256xf32>
    tpu.vector_store %arg5[%c4_26, %c256_27], %39 {strides = array<i32>} : memref<36x512xf32, #tpu.memory_space<vmem>>, vector<4x256xf32>,
    %c0_28 = arith.constant 0 : index
    %c0_29 = arith.constant 0 : index
    %c113 = arith.constant 113 : index
    %41 = vector.load %arg4[%c0_28, %c0_29, %c113] : memref<2x4x512xf32, #tpu.memory_space<vmem>>, vector<1x4x256xf32>
    %42 = vector.shape_cast %41 : vector<1x4x256xf32> to vector<4x256xf32>
    %cst_30 = arith.constant 0.000000e+00 : f32
    %43 = vector.broadcast %cst_30 : f32 to vector<4x256xf32>
    %44 = arith.select %24, %42, %43 : vector<4x256xi1>, vector<4x256xf32>
    %c8 = arith.constant 8 : index
    %c0_31 = arith.constant 0 : index
    %45 = vector.load %arg5[%c8, %c0_31] : memref<36x512xf32, #tpu.memory_space<vmem>>, vector<4x256xf32>
    tpu.vector_store %arg5[%c8, %c0_31], %44 {strides = array<i32>} : memref<36x512xf32, #tpu.memory_space<vmem>>, vector<4x256xf32>,
    %c1_32 = arith.constant 1 : index
    %c0_33 = arith.constant 0 : index
    %c113_34 = arith.constant 113 : index
    %46 = vector.load %arg4[%c1_32, %c0_33, %c113_34] : memref<2x4x512xf32, #tpu.memory_space<vmem>>, vector<1x4x256xf32>
    %47 = vector.shape_cast %46 : vector<1x4x256xf32> to vector<4x256xf32>
    %cst_35 = arith.constant 0.000000e+00 : f32
    %48 = vector.broadcast %cst_35 : f32 to vector<4x256xf32>
    %49 = arith.select %24, %47, %48 : vector<4x256xi1>, vector<4x256xf32>
    %c8_36 = arith.constant 8 : index
    %c256_37 = arith.constant 256 : index
    %50 = vector.load %arg5[%c8_36, %c256_37] : memref<36x512xf32, #tpu.memory_space<vmem>>, vector<4x256xf32>
    tpu.vector_store %arg5[%c8_36, %c256_37], %49 {strides = array<i32>} : memref<36x512xf32, #tpu.memory_space<vmem>>, vector<4x256xf32>,
    %c0_38 = arith.constant 0 : index
    %c0_39 = arith.constant 0 : index
    %c127 = arith.constant 127 : index
    %51 = vector.load %arg4[%c0_38, %c0_39, %c127] : memref<2x4x512xf32, #tpu.memory_space<vmem>>, vector<1x4x256xf32>
    %52 = vector.shape_cast %51 : vector<1x4x256xf32> to vector<4x256xf32>
    %cst_40 = arith.constant 0.000000e+00 : f32
    %53 = vector.broadcast %cst_40 : f32 to vector<4x256xf32>
    %54 = arith.select %22, %52, %53 : vector<4x256xi1>, vector<4x256xf32>
    %c12 = arith.constant 12 : index
    %c0_41 = arith.constant 0 : index
    %55 = vector.load %arg5[%c12, %c0_41] : memref<36x512xf32, #tpu.memory_space<vmem>>, vector<4x256xf32>
    tpu.vector_store %arg5[%c12, %c0_41], %54 {strides = array<i32>} : memref<36x512xf32, #tpu.memory_space<vmem>>, vector<4x256xf32>,
    %c1_42 = arith.constant 1 : index
    %c0_43 = arith.constant 0 : index
    %c127_44 = arith.constant 127 : index
    %56 = vector.load %arg4[%c1_42, %c0_43, %c127_44] : memref<2x4x512xf32, #tpu.memory_space<vmem>>, vector<1x4x256xf32>
    %57 = vector.shape_cast %56 : vector<1x4x256xf32> to vector<4x256xf32>
    %cst_45 = arith.constant 0.000000e+00 : f32
    %58 = vector.broadcast %cst_45 : f32 to vector<4x256xf32>
    %59 = arith.select %22, %57, %58 : vector<4x256xi1>, vector<4x256xf32>
    %c12_46 = arith.constant 12 : index
    %c256_47 = arith.constant 256 : index
    %60 = vector.load %arg5[%c12_46, %c256_47] : memref<36x512xf32, #tpu.memory_space<vmem>>, vector<4x256xf32>
    tpu.vector_store %arg5[%c12_46, %c256_47], %59 {strides = array<i32>} : memref<36x512xf32, #tpu.memory_space<vmem>>, vector<4x256xf32>,
    %c0_48 = arith.constant 0 : index
    %c0_49 = arith.constant 0 : index
    %c128_50 = arith.constant 128 : index
    %61 = vector.load %arg4[%c0_48, %c0_49, %c128_50] : memref<2x4x512xf32, #tpu.memory_space<vmem>>, vector<1x4x256xf32>
    %62 = vector.shape_cast %61 : vector<1x4x256xf32> to vector<4x256xf32>
    %c16 = arith.constant 16 : index
    %c0_51 = arith.constant 0 : index
    %63 = vector.load %arg5[%c16, %c0_51] : memref<36x512xf32, #tpu.memory_space<vmem>>, vector<4x256xf32>
    tpu.vector_store %arg5[%c16, %c0_51], %62 {strides = array<i32>} : memref<36x512xf32, #tpu.memory_space<vmem>>, vector<4x256xf32>,
    %c1_52 = arith.constant 1 : index
    %c0_53 = arith.constant 0 : index
    %c128_54 = arith.constant 128 : index
    %64 = vector.load %arg4[%c1_52, %c0_53, %c128_54] : memref<2x4x512xf32, #tpu.memory_space<vmem>>, vector<1x4x256xf32>
    %65 = vector.shape_cast %64 : vector<1x4x256xf32> to vector<4x256xf32>
    %c16_55 = arith.constant 16 : index
    %c256_56 = arith.constant 256 : index
    %66 = vector.load %arg5[%c16_55, %c256_56] : memref<36x512xf32, #tpu.memory_space<vmem>>, vector<4x256xf32>
    tpu.vector_store %arg5[%c16_55, %c256_56], %65 {strides = array<i32>} : memref<36x512xf32, #tpu.memory_space<vmem>>, vector<4x256xf32>,
    %c0_57 = arith.constant 0 : index
    %c0_58 = arith.constant 0 : index
    %c129 = arith.constant 129 : index
    %67 = vector.load %arg4[%c0_57, %c0_58, %c129] : memref<2x4x512xf32, #tpu.memory_space<vmem>>, vector<1x4x256xf32>
    %68 = vector.shape_cast %67 : vector<1x4x256xf32> to vector<4x256xf32>
    %cst_59 = arith.constant 0.000000e+00 : f32
    %69 = vector.broadcast %cst_59 : f32 to vector<4x256xf32>
    %70 = arith.select %24, %68, %69 : vector<4x256xi1>, vector<4x256xf32>
    %c20 = arith.constant 20 : index
    %c0_60 = arith.constant 0 : index
    %71 = vector.load %arg5[%c20, %c0_60] : memref<36x512xf32, #tpu.memory_space<vmem>>, vector<4x256xf32>
    tpu.vector_store %arg5[%c20, %c0_60], %70 {strides = array<i32>} : memref<36x512xf32, #tpu.memory_space<vmem>>, vector<4x256xf32>,
    %c1_61 = arith.constant 1 : index
    %c0_62 = arith.constant 0 : index
    %c129_63 = arith.constant 129 : index
    %72 = vector.load %arg4[%c1_61, %c0_62, %c129_63] : memref<2x4x512xf32, #tpu.memory_space<vmem>>, vector<1x4x256xf32>
    %73 = vector.shape_cast %72 : vector<1x4x256xf32> to vector<4x256xf32>
    %cst_64 = arith.constant 0.000000e+00 : f32
    %74 = vector.broadcast %cst_64 : f32 to vector<4x256xf32>
    %75 = arith.select %24, %73, %74 : vector<4x256xi1>, vector<4x256xf32>
    %c20_65 = arith.constant 20 : index
    %c256_66 = arith.constant 256 : index
    %76 = vector.load %arg5[%c20_65, %c256_66] : memref<36x512xf32, #tpu.memory_space<vmem>>, vector<4x256xf32>
    tpu.vector_store %arg5[%c20_65, %c256_66], %75 {strides = array<i32>} : memref<36x512xf32, #tpu.memory_space<vmem>>, vector<4x256xf32>,
    %c0_67 = arith.constant 0 : index
    %c0_68 = arith.constant 0 : index
    %c143 = arith.constant 143 : index
    %77 = vector.load %arg4[%c0_67, %c0_68, %c143] : memref<2x4x512xf32, #tpu.memory_space<vmem>>, vector<1x4x256xf32>
    %78 = vector.shape_cast %77 : vector<1x4x256xf32> to vector<4x256xf32>
    %cst_69 = arith.constant 0.000000e+00 : f32
    %79 = vector.broadcast %cst_69 : f32 to vector<4x256xf32>
    %80 = arith.select %22, %78, %79 : vector<4x256xi1>, vector<4x256xf32>
    %c24 = arith.constant 24 : index
    %c0_70 = arith.constant 0 : index
    %81 = vector.load %arg5[%c24, %c0_70] : memref<36x512xf32, #tpu.memory_space<vmem>>, vector<4x256xf32>
    tpu.vector_store %arg5[%c24, %c0_70], %80 {strides = array<i32>} : memref<36x512xf32, #tpu.memory_space<vmem>>, vector<4x256xf32>,
    %c1_71 = arith.constant 1 : index
    %c0_72 = arith.constant 0 : index
    %c143_73 = arith.constant 143 : index
    %82 = vector.load %arg4[%c1_71, %c0_72, %c143_73] : memref<2x4x512xf32, #tpu.memory_space<vmem>>, vector<1x4x256xf32>
    %83 = vector.shape_cast %82 : vector<1x4x256xf32> to vector<4x256xf32>
    %cst_74 = arith.constant 0.000000e+00 : f32
    %84 = vector.broadcast %cst_74 : f32 to vector<4x256xf32>
    %85 = arith.select %22, %83, %84 : vector<4x256xi1>, vector<4x256xf32>
    %c24_75 = arith.constant 24 : index
    %c256_76 = arith.constant 256 : index
    %86 = vector.load %arg5[%c24_75, %c256_76] : memref<36x512xf32, #tpu.memory_space<vmem>>, vector<4x256xf32>
    tpu.vector_store %arg5[%c24_75, %c256_76], %85 {strides = array<i32>} : memref<36x512xf32, #tpu.memory_space<vmem>>, vector<4x256xf32>,
    %c0_77 = arith.constant 0 : index
    %c0_78 = arith.constant 0 : index
    %c144 = arith.constant 144 : index
    %87 = vector.load %arg4[%c0_77, %c0_78, %c144] : memref<2x4x512xf32, #tpu.memory_space<vmem>>, vector<1x4x256xf32>
    %88 = vector.shape_cast %87 : vector<1x4x256xf32> to vector<4x256xf32>
    %c28 = arith.constant 28 : index
    %c0_79 = arith.constant 0 : index
    %89 = vector.load %arg5[%c28, %c0_79] : memref<36x512xf32, #tpu.memory_space<vmem>>, vector<4x256xf32>
    tpu.vector_store %arg5[%c28, %c0_79], %88 {strides = array<i32>} : memref<36x512xf32, #tpu.memory_space<vmem>>, vector<4x256xf32>,
    %c1_80 = arith.constant 1 : index
    %c0_81 = arith.constant 0 : index
    %c144_82 = arith.constant 144 : index
    %90 = vector.load %arg4[%c1_80, %c0_81, %c144_82] : memref<2x4x512xf32, #tpu.memory_space<vmem>>, vector<1x4x256xf32>
    %91 = vector.shape_cast %90 : vector<1x4x256xf32> to vector<4x256xf32>
    %c28_83 = arith.constant 28 : index
    %c256_84 = arith.constant 256 : index
    %92 = vector.load %arg5[%c28_83, %c256_84] : memref<36x512xf32, #tpu.memory_space<vmem>>, vector<4x256xf32>
    tpu.vector_store %arg5[%c28_83, %c256_84], %91 {strides = array<i32>} : memref<36x512xf32, #tpu.memory_space<vmem>>, vector<4x256xf32>,
    %c0_85 = arith.constant 0 : index
    %c0_86 = arith.constant 0 : index
    %c145 = arith.constant 145 : index
    %93 = vector.load %arg4[%c0_85, %c0_86, %c145] : memref<2x4x512xf32, #tpu.memory_space<vmem>>, vector<1x4x256xf32>
    %94 = vector.shape_cast %93 : vector<1x4x256xf32> to vector<4x256xf32>
    %cst_87 = arith.constant 0.000000e+00 : f32
    %95 = vector.broadcast %cst_87 : f32 to vector<4x256xf32>
    %96 = arith.select %24, %94, %95 : vector<4x256xi1>, vector<4x256xf32>
    %c32 = arith.constant 32 : index
    %c0_88 = arith.constant 0 : index
    %97 = vector.load %arg5[%c32, %c0_88] : memref<36x512xf32, #tpu.memory_space<vmem>>, vector<4x256xf32>
    tpu.vector_store %arg5[%c32, %c0_88], %96 {strides = array<i32>} : memref<36x512xf32, #tpu.memory_space<vmem>>, vector<4x256xf32>,
    %c1_89 = arith.constant 1 : index
    %c0_90 = arith.constant 0 : index
    %c145_91 = arith.constant 145 : index
    %98 = vector.load %arg4[%c1_89, %c0_90, %c145_91] : memref<2x4x512xf32, #tpu.memory_space<vmem>>, vector<1x4x256xf32>
    %99 = vector.shape_cast %98 : vector<1x4x256xf32> to vector<4x256xf32>
    %cst_92 = arith.constant 0.000000e+00 : f32
    %100 = vector.broadcast %cst_92 : f32 to vector<4x256xf32>
    %101 = arith.select %24, %99, %100 : vector<4x256xi1>, vector<4x256xf32>
    %c32_93 = arith.constant 32 : index
    %c256_94 = arith.constant 256 : index
    %102 = vector.load %arg5[%c32_93, %c256_94] : memref<36x512xf32, #tpu.memory_space<vmem>>, vector<4x256xf32>
    tpu.vector_store %arg5[%c32_93, %c256_94], %101 {strides = array<i32>} : memref<36x512xf32, #tpu.memory_space<vmem>>, vector<4x256xf32>,
    %c0_95 = arith.constant 0 : index
    %c0_96 = arith.constant 0 : index
    %103 = vector.load %arg1[%c0_95, %c0_96] : memref<8x36xf32, #tpu.memory_space<vmem>>, vector<8x36xf32>
    %c0_97 = arith.constant 0 : index
    %c0_98 = arith.constant 0 : index
    %104 = vector.load %arg5[%c0_97, %c0_98] : memref<36x512xf32, #tpu.memory_space<vmem>>, vector<36x512xf32>
    %cst_99 = arith.constant dense<0.000000e+00> : vector<8x512xf32>
    %105 = tpu.matmul %103, %104, %cst_99 {dimension_numbers = #tpu.dot_dimension_numbers<[1], [0], [0], [1], [0, 0, 1, 1], [], []>, precision = #tpu.contract_precision<fp32>} : vector<8x36xf32>, vector<36x512xf32>, vector<8x512xf32> -> vector<8x512xf32>
    %c0_100 = arith.constant 0 : index
    %c0_101 = arith.constant 0 : index
    %106 = vector.load %arg2[%c0_100, %c0_101] : memref<8x1xf32, #tpu.memory_space<vmem>>, vector<8x1xf32>
    %107 = vector.broadcast %106 : vector<8x1xf32> to vector<8x512xf32>
    %108 = arith.addf %105, %107 : vector<8x512xf32>
    %109 = vector.extract_strided_slice %108 {offsets = [0, 0], sizes = [8, 256], strides = [1, 1]} : vector<8x512xf32> to vector<8x256xf32>
    %c0_102 = arith.constant 0 : index
    %c0_103 = arith.constant 0 : index
    %c0_104 = arith.constant 0 : index
    %110 = vector.load %arg3[%c0_102, %c0_103, %c0_104] : memref<2x8x256xf32, #tpu.memory_space<vmem>>, vector<1x8x256xf32>
    %111 = vector.shape_cast %110 : vector<1x8x256xf32> to vector<8x256xf32>
    %112 = vector.shape_cast %109 : vector<8x256xf32> to vector<1x8x256xf32>
    tpu.vector_store %arg3[%c0_102, %c0_103, %c0_104], %112 {strides = array<i32>} : memref<2x8x256xf32, #tpu.memory_space<vmem>>, vector<1x8x256xf32>,
    %113 = vector.extract_strided_slice %108 {offsets = [0, 256], sizes = [8, 256], strides = [1, 1]} : vector<8x512xf32> to vector<8x256xf32>
    %c1_105 = arith.constant 1 : index
    %c0_106 = arith.constant 0 : index
    %c0_107 = arith.constant 0 : index
    %114 = vector.load %arg3[%c1_105, %c0_106, %c0_107] : memref<2x8x256xf32, #tpu.memory_space<vmem>>, vector<1x8x256xf32>
    %115 = vector.shape_cast %114 : vector<1x8x256xf32> to vector<8x256xf32>
    %116 = vector.shape_cast %113 : vector<8x256xf32> to vector<1x8x256xf32>
    tpu.vector_store %arg3[%c1_105, %c0_106, %c0_107], %116 {strides = array<i32>} : memref<2x8x256xf32, #tpu.memory_space<vmem>>, vector<1x8x256xf32>,
    return
  }
}

</mosaic_0001>

<llo_original>
// kernel: conv2d_pallas.1
$region0: #{conv2d_pallas.1}
  #allocation0 [shape = 'u32[]', space=smem, size = 0x4, offset = 0x4, fixed_abs, tag = 'smem constant byte address 0x4 - core index']
  #allocation1 [shape = 'u32[144,128]{1,0:T(1,128)}', space=vmem, size = 0x12000, scoped, tag = 'internal scratch']
  #allocation2 [shape = 'f32[2,4,512]{2,1,0:T(4,128)}', space=vmem, size = 0x4000, scoped, tag = 'scratch operand']
  #allocation3 [shape = 'f32[36,512]{1,0:T(8,128)}', space=vmem, size = 0x14000, scoped, tag = 'scratch operand']
  %s0 = inlined_call_operand.vmem [shape: f32[2,4,256], index: 0, kind: input, shape index: {}]
  %s1 = inlined_call_operand.vmem [shape: f32[8,36], index: 1, kind: input, shape index: {}]
  %s2 = inlined_call_operand.vmem [shape: f32[8,1], index: 2, kind: input, shape index: {}]
  %s3 = inlined_call_operand.vmem [shape: f32[2,8,256], index: 3, kind: output, shape index: {}]
  %s4 = sld [smem:[#allocation0]]
  $region22: #{conv2d_pallas.1} parent=0
    _
  %s6 = ssub.s32 1, %s4
  %s7 = scalar_select 0, %s6, %s4
  // Predicated region
  $region2: #{conv2d_pallas.1} parent=0 // pred_check
    _
  $region3: #{conv2d_pallas.1} parent=0 // pred_check_branch
    %9 = sbr.rel (0) target = $region5
  $region4: #{conv2d_pallas.1} parent=0 // pred_region
    _
  $region5: #{conv2d_pallas.1} parent=0 // pred_fallthru
    _
  // Predicated region
  $region6: #{conv2d_pallas.1} parent=0 // pred_check
    _
  $region7: #{conv2d_pallas.1} parent=0 // pred_check_branch
    %11 = sbr.rel (0) target = $region9
  $region8: #{conv2d_pallas.1} parent=0 // pred_region
    _
  $region9: #{conv2d_pallas.1} parent=0 // pred_fallthru
    _
  // Predicated region
  $region10: #{conv2d_pallas.1} parent=0 // pred_check
    _
  $region11: #{conv2d_pallas.1} parent=0 // pred_check_branch
    %13 = sbr.rel (0) target = $region13
  $region12: #{conv2d_pallas.1} parent=0 // pred_region
    _
  $region13: #{conv2d_pallas.1} parent=0 // pred_fallthru
    _
  %14 = vst [vmem:[#allocation2] sm:$0xff] 0.0
  %15 = vst [vmem:[#allocation2 + $0x8] sm:$0xff] 0.0
  %16 = vst [vmem:[#allocation2 + $0x10] sm:$0xff] 0.0
  %17 = vst [vmem:[#allocation2 + $0x18] sm:$0xff] 0.0
  %v18 = vld [vmem:[%s0] sm:$0xff]
  %v19 = vld [vmem:[%s0 + $0x8] sm:$0xff]
  %20 = vst [vmem:[#allocation2 + $0x4] sm:$0xff] %v18
  %21 = vst [vmem:[#allocation2 + $0x14] sm:$0xff] %v19
  %v22 = vlaneseq
  %v23 = vand.u32 %v22, 127
  %v24 = vadd.s32 %v23, 128
  %vm25 = vcmp.lt.s32.totalorder %v23, 0
  %v26 = vsub.s32 0, %v23
  %v27 = vsel %vm25, %v26, %v23
  %v28 = vshrl.u32 %v27, 4
  %v29 = vand.u32 %v27, 15
  %v30 = vsub.s32 0, %v29
  %v31 = vsel %vm25, %v30, %v29
  %vm32 = vcmp.lt.s32.totalorder %v24, 0
  %v33 = vsub.s32 0, %v24
  %v34 = vsel %vm32, %v33, %v24
  %v35 = vshrl.u32 %v34, 4
  %v36 = vand.u32 %v34, 15
  %v37 = vsub.s32 0, %v36
  %v38 = vsel %vm32, %v37, %v36
  %vm39 = vcmp.ne.s32.totalorder %v31, 0
  %vm40 = vcmp.ne.s32.totalorder %v38, 0
  %vm41 = vcmp.lt.s32.totalorder %v31, 0
  %vm42 = vcmp.lt.s32.totalorder %v38, 0
  %vm43 = vmand %vm41, %vm39
  %vm44 = vmand %vm42, %vm40
  %v45 = vadd.s32 %v31, 16
  %v46 = vadd.s32 %v38, 16
  %v47 = vsel %vm43, %v45, %v31
  %v48 = vsel %vm44, %v46, %v38
  %vm49 = vcmp.ne.s32.totalorder %v47, 0
  %vm50 = vcmp.ne.s32.totalorder %v48, 0
  %vm51 = vcmp.ne.s32.totalorder %v47, 15
  %vm52 = vcmp.ne.s32.totalorder %v48, 15
  %v53 = vld [vmem:[#allocation2] sm:$0xff]
  %v54 = vld [vmem:[#allocation2 + $0x8] sm:$0xf]
  %v57 = vcombine.high %v53, %v53
  %58 = vrot.lane.b32.xlu0 %v53, 17
  %v59 = vpop.permute.xlu0 %58
  %60 = vrot.lane.b32.xlu0 %v57, 17
  %v61 = vpop.permute.xlu0 %60
  %62 = vrot.lane.b32.xlu0 %v54, 17
  %v63 = vpop.permute.xlu0 %62
  %vm64 = vcmask 138240
  %v65 = vsel %vm64, %v59, %v61
  %v66 = vsel %vm64, %v61, %v63
  %v69 = vsel %vm49, %v65, 0.0
  %v70 = vsel %vm50, %v66, 0.0
  %71 = vst [vmem:[#allocation3] sm:$0xf] %v69
  %72 = vst [vmem:[#allocation3 + $0x8] sm:$0xf] %v70
  %s73 = scalar_lea.vmem [#allocation2], 16
  %v74 = vld [vmem:[%s73] sm:$0xff]
  %v75 = vld [vmem:[%s73 + $0x8] sm:$0xf]
  %v78 = vcombine.high %v74, %v74
  %79 = vrot.lane.b32.xlu0 %v74, 17
  %v80 = vpop.permute.xlu0 %79
  %81 = vrot.lane.b32.xlu0 %v78, 17
  %v82 = vpop.permute.xlu0 %81
  %83 = vrot.lane.b32.xlu0 %v75, 17
  %v84 = vpop.permute.xlu0 %83
  %v85 = vsel %vm64, %v80, %v82
  %v86 = vsel %vm64, %v82, %v84
  %v89 = vsel %vm49, %v85, 0.0
  %v90 = vsel %vm50, %v86, 0.0
  %91 = vst [vmem:[#allocation3 + $0x10] sm:$0xf] %v89
  %92 = vst [vmem:[#allocation3 + $0x18] sm:$0xf] %v90
  %v93 = vld [vmem:[#allocation2] sm:$0xff]
  %v94 = vld [vmem:[#allocation2 + $0x8] sm:$0xf]
  %v97 = vcombine.low %v93, %v93
  %v98 = vcombine.low %v94, %v94
  %99 = vrot.lane.b32.xlu0 %v97, 16
  %v100 = vpop.permute.xlu0 %99
  %101 = vrot.lane.b32.xlu0 %v93, 16
  %v102 = vpop.permute.xlu0 %101
  %103 = vrot.lane.b32.xlu0 %v98, 16
  %v104 = vpop.permute.xlu0 %103
  %vm105 = vcmask 130048
  %v106 = vsel %vm105, %v100, %v102
  %v107 = vsel %vm105, %v102, %v104
  %110 = vst [vmem:[#allocation3] sm:$0xf0] %v106
  %111 = vst [vmem:[#allocation3 + $0x8] sm:$0xf0] %v107
  %v112 = vld [vmem:[%s73] sm:$0xff]
  %v113 = vld [vmem:[%s73 + $0x8] sm:$0xf]
  %v116 = vcombine.low %v112, %v112
  %v117 = vcombine.low %v113, %v113
  %118 = vrot.lane.b32.xlu0 %v116, 16
  %v119 = vpop.permute.xlu0 %118
  %120 = vrot.lane.b32.xlu0 %v112, 16
  %v121 = vpop.permute.xlu0 %120
  %122 = vrot.lane.b32.xlu0 %v117, 16
  %v123 = vpop.permute.xlu0 %122
  %v124 = vsel %vm105, %v119, %v121
  %v125 = vsel %vm105, %v121, %v123
  %128 = vst [vmem:[#allocation3 + $0x10] sm:$0xf0] %v124
  %129 = vst [vmem:[#allocation3 + $0x18] sm:$0xf0] %v125
  %v130 = vld [vmem:[#allocation2] sm:$0xff]
  %v131 = vld [vmem:[#allocation2 + $0x8] sm:$0xf]
  %v134 = vcombine.high %v130, %v130
  %135 = vrot.lane.b32.xlu0 %v130, 15
  %v136 = vpop.permute.xlu0 %135
  %137 = vrot.lane.b32.xlu0 %v134, 15
  %v138 = vpop.permute.xlu0 %137
  %139 = vrot.lane.b32.xlu0 %v131, 15
  %v140 = vpop.permute.xlu0 %139
  %vm141 = vcmask 121856
  %v142 = vsel %vm141, %v136, %v138
  %v143 = vsel %vm141, %v138, %v140
  %v146 = vsel %vm51, %v142, 0.0
  %v147 = vsel %vm52, %v143, 0.0
  %148 = vst [vmem:[#allocation3 + $0x20] sm:$0xf] %v146
  %149 = vst [vmem:[#allocation3 + $0x28] sm:$0xf] %v147
  %v150 = vld [vmem:[%s73] sm:$0xff]
  %v151 = vld [vmem:[%s73 + $0x8] sm:$0xf]
  %v154 = vcombine.high %v150, %v150
  %155 = vrot.lane.b32.xlu0 %v150, 15
  %v156 = vpop.permute.xlu0 %155
  %157 = vrot.lane.b32.xlu0 %v154, 15
  %v158 = vpop.permute.xlu0 %157
  %159 = vrot.lane.b32.xlu0 %v151, 15
  %v160 = vpop.permute.xlu0 %159
  %v161 = vsel %vm141, %v156, %v158
  %v162 = vsel %vm141, %v158, %v160
  %v165 = vsel %vm51, %v161, 0.0
  %v166 = vsel %vm52, %v162, 0.0
  %167 = vst [vmem:[#allocation3 + $0x30] sm:$0xf] %v165
  %168 = vst [vmem:[#allocation3 + $0x38] sm:$0xf] %v166
  %v169 = vld [vmem:[#allocation2] sm:$0xff]
  %v170 = vld [vmem:[#allocation2 + $0x8] sm:$0xf]
  %v173 = vcombine.high %v169, %v169
  %174 = vrot.lane.b32.xlu0 %v169, 1
  %v175 = vpop.permute.xlu0 %174
  %176 = vrot.lane.b32.xlu0 %v173, 1
  %v177 = vpop.permute.xlu0 %176
  %178 = vrot.lane.b32.xlu0 %v170, 1
  %v179 = vpop.permute.xlu0 %178
  %vm180 = vcmask 7168
  %v181 = vsel %vm180, %v175, %v177
  %v182 = vsel %vm180, %v177, %v179
  %v185 = vsel %vm49, %v181, 0.0
  %v186 = vsel %vm50, %v182, 0.0
  %v189 = vrot.slane %v185, 4
  %v190 = vrot.slane %v186, 4
  %193 = vst [vmem:[#allocation3 + $0x20] sm:$0xf0] %v189
  %194 = vst [vmem:[#allocation3 + $0x28] sm:$0xf0] %v190
  %v195 = vld [vmem:[%s73] sm:$0xff]
  %v196 = vld [vmem:[%s73 + $0x8] sm:$0xf]
  %v199 = vcombine.high %v195, %v195
  %200 = vrot.lane.b32.xlu0 %v195, 1
  %v201 = vpop.permute.xlu0 %200
  %202 = vrot.lane.b32.xlu0 %v199, 1
  %v203 = vpop.permute.xlu0 %202
  %204 = vrot.lane.b32.xlu0 %v196, 1
  %v205 = vpop.permute.xlu0 %204
  %v206 = vsel %vm180, %v201, %v203
  %v207 = vsel %vm180, %v203, %v205
  %v210 = vsel %vm49, %v206, 0.0
  %v211 = vsel %vm50, %v207, 0.0
  %v214 = vrot.slane %v210, 4
  %v215 = vrot.slane %v211, 4
  %218 = vst [vmem:[#allocation3 + $0x30] sm:$0xf0] %v214
  %219 = vst [vmem:[#allocation3 + $0x38] sm:$0xf0] %v215
  %v220 = vld [vmem:[#allocation2 + $0x4] sm:$0xff]
  %v222 = vcombine.high %v220, %v220
  %224 = vst [vmem:[#allocation3 + $0x40] sm:$0xf] %v220
  %225 = vst [vmem:[#allocation3 + $0x48] sm:$0xf] %v222
  %v226 = vld [vmem:[%s73 + $0x4] sm:$0xff]
  %v228 = vcombine.high %v226, %v226
  %230 = vst [vmem:[#allocation3 + $0x50] sm:$0xf] %v226
  %231 = vst [vmem:[#allocation3 + $0x58] sm:$0xf] %v228
  %v232 = vld [vmem:[#allocation2 + $0x4] sm:$0xff]
  %v233 = vld [vmem:[#allocation2 + $0xc] sm:$0xf]
  %v236 = vcombine.high %v232, %v232
  %237 = vrot.lane.b32.xlu0 %v232, 127
  %v238 = vpop.permute.xlu0 %237
  %239 = vrot.lane.b32.xlu0 %v236, 127
  %v240 = vpop.permute.xlu0 %239
  %241 = vrot.lane.b32.xlu0 %v233, 127
  %v242 = vpop.permute.xlu0 %241
  %vm243 = vcmask 1039360
  %v244 = vsel %vm243, %v238, %v240
  %v245 = vsel %vm243, %v240, %v242
  %v248 = vsel %vm51, %v244, 0.0
  %v249 = vsel %vm52, %v245, 0.0
  %v252 = vrot.slane %v248, 4
  %v253 = vrot.slane %v249, 4
  %256 = vst [vmem:[#allocation3 + $0x40] sm:$0xf0] %v252
  %257 = vst [vmem:[#allocation3 + $0x48] sm:$0xf0] %v253
  %v258 = vld [vmem:[%s73 + $0x4] sm:$0xff]
  %v259 = vld [vmem:[%s73 + $0xc] sm:$0xf]
  %v262 = vcombine.high %v258, %v258
  %263 = vrot.lane.b32.xlu0 %v258, 127
  %v264 = vpop.permute.xlu0 %263
  %265 = vrot.lane.b32.xlu0 %v262, 127
  %v266 = vpop.permute.xlu0 %265
  %267 = vrot.lane.b32.xlu0 %v259, 127
  %v268 = vpop.permute.xlu0 %267
  %v269 = vsel %vm243, %v264, %v266
  %v270 = vsel %vm243, %v266, %v268
  %v273 = vsel %vm51, %v269, 0.0
  %v274 = vsel %vm52, %v270, 0.0
  %v277 = vrot.slane %v273, 4
  %v278 = vrot.slane %v274, 4
  %281 = vst [vmem:[#allocation3 + $0x50] sm:$0xf0] %v277
  %282 = vst [vmem:[#allocation3 + $0x58] sm:$0xf0] %v278
  %v283 = vld [vmem:[#allocation2 + $0x4] sm:$0xff]
  %v284 = vld [vmem:[#allocation2 + $0xc] sm:$0xf]
  %v287 = vcombine.high %v283, %v283
  %288 = vrot.lane.b32.xlu0 %v283, 113
  %v289 = vpop.permute.xlu0 %288
  %290 = vrot.lane.b32.xlu0 %v287, 113
  %v291 = vpop.permute.xlu0 %290
  %292 = vrot.lane.b32.xlu0 %v284, 113
  %v293 = vpop.permute.xlu0 %292
  %vm294 = vcmask 924672
  %v295 = vsel %vm294, %v289, %v291
  %v296 = vsel %vm294, %v291, %v293
  %v299 = vsel %vm49, %v295, 0.0
  %v300 = vsel %vm50, %v296, 0.0
  %301 = vst [vmem:[#allocation3 + $0x60] sm:$0xf] %v299
  %302 = vst [vmem:[#allocation3 + $0x68] sm:$0xf] %v300
  %v303 = vld [vmem:[%s73 + $0x4] sm:$0xff]
  %v304 = vld [vmem:[%s73 + $0xc] sm:$0xf]
  %v307 = vcombine.high %v303, %v303
  %308 = vrot.lane.b32.xlu0 %v303, 113
  %v309 = vpop.permute.xlu0 %308
  %310 = vrot.lane.b32.xlu0 %v307, 113
  %v311 = vpop.permute.xlu0 %310
  %312 = vrot.lane.b32.xlu0 %v304, 113
  %v313 = vpop.permute.xlu0 %312
  %v314 = vsel %vm294, %v309, %v311
  %v315 = vsel %vm294, %v311, %v313
  %v318 = vsel %vm49, %v314, 0.0
  %v319 = vsel %vm50, %v315, 0.0
  %320 = vst [vmem:[#allocation3 + $0x70] sm:$0xf] %v318
  %321 = vst [vmem:[#allocation3 + $0x78] sm:$0xf] %v319
  %v322 = vld [vmem:[#allocation2 + $0x4] sm:$0xff]
  %v323 = vld [vmem:[#allocation2 + $0xc] sm:$0xf]
  %v326 = vcombine.low %v322, %v322
  %v327 = vcombine.low %v323, %v323
  %328 = vrot.lane.b32.xlu0 %v326, 112
  %v329 = vpop.permute.xlu0 %328
  %330 = vrot.lane.b32.xlu0 %v322, 112
  %v331 = vpop.permute.xlu0 %330
  %332 = vrot.lane.b32.xlu0 %v327, 112
  %v333 = vpop.permute.xlu0 %332
  %vm334 = vcmask 916480
  %v335 = vsel %vm334, %v329, %v331
  %v336 = vsel %vm334, %v331, %v333
  %339 = vst [vmem:[#allocation3 + $0x60] sm:$0xf0] %v335
  %340 = vst [vmem:[#allocation3 + $0x68] sm:$0xf0] %v336
  %v341 = vld [vmem:[%s73 + $0x4] sm:$0xff]
  %v342 = vld [vmem:[%s73 + $0xc] sm:$0xf]
  %v345 = vcombine.low %v341, %v341
  %v346 = vcombine.low %v342, %v342
  %347 = vrot.lane.b32.xlu0 %v345, 112
  %v348 = vpop.permute.xlu0 %347
  %349 = vrot.lane.b32.xlu0 %v341, 112
  %v350 = vpop.permute.xlu0 %349
  %351 = vrot.lane.b32.xlu0 %v346, 112
  %v352 = vpop.permute.xlu0 %351
  %v353 = vsel %vm334, %v348, %v350
  %v354 = vsel %vm334, %v350, %v352
  %357 = vst [vmem:[#allocation3 + $0x70] sm:$0xf0] %v353
  %358 = vst [vmem:[#allocation3 + $0x78] sm:$0xf0] %v354
  %v359 = vld [vmem:[#allocation2 + $0x4] sm:$0xff]
  %v360 = vld [vmem:[#allocation2 + $0xc] sm:$0xf]
  %v363 = vcombine.high %v359, %v359
  %364 = vrot.lane.b32.xlu0 %v359, 111
  %v365 = vpop.permute.xlu0 %364
  %366 = vrot.lane.b32.xlu0 %v363, 111
  %v367 = vpop.permute.xlu0 %366
  %368 = vrot.lane.b32.xlu0 %v360, 111
  %v369 = vpop.permute.xlu0 %368
  %vm370 = vcmask 908288
  %v371 = vsel %vm370, %v365, %v367
  %v372 = vsel %vm370, %v367, %v369
  %v375 = vsel %vm51, %v371, 0.0
  %v376 = vsel %vm52, %v372, 0.0
  %377 = vst [vmem:[#allocation3 + $0x80] sm:$0xf] %v375
  %378 = vst [vmem:[#allocation3 + $0x88] sm:$0xf] %v376
  %v379 = vld [vmem:[%s73 + $0x4] sm:$0xff]
  %v380 = vld [vmem:[%s73 + $0xc] sm:$0xf]
  %v383 = vcombine.high %v379, %v379
  %384 = vrot.lane.b32.xlu0 %v379, 111
  %v385 = vpop.permute.xlu0 %384
  %386 = vrot.lane.b32.xlu0 %v383, 111
  %v387 = vpop.permute.xlu0 %386
  %388 = vrot.lane.b32.xlu0 %v380, 111
  %v389 = vpop.permute.xlu0 %388
  %v390 = vsel %vm370, %v385, %v387
  %v391 = vsel %vm370, %v387, %v389
  %v394 = vsel %vm51, %v390, 0.0
  %v395 = vsel %vm52, %v391, 0.0
  %396 = vst [vmem:[#allocation3 + $0x90] sm:$0xf] %v394
  %397 = vst [vmem:[#allocation3 + $0x98] sm:$0xf] %v395
  %v398 = vld [vmem:[%s1] sm:$0xff]
  %v399 = vld [vmem:[#allocation3] sm:$0xff]
  %v400 = vld [vmem:[#allocation3 + $0x8] sm:$0xff]
  %v401 = vld [vmem:[#allocation3 + $0x10] sm:$0xff]
  %v402 = vld [vmem:[#allocation3 + $0x18] sm:$0xff]
  %v403 = vld [vmem:[#allocation3 + $0x20] sm:$0xff]
  %v404 = vld [vmem:[#allocation3 + $0x28] sm:$0xff]
  %v405 = vld [vmem:[#allocation3 + $0x30] sm:$0xff]
  %v406 = vld [vmem:[#allocation3 + $0x38] sm:$0xff]
  %v407 = vld [vmem:[#allocation3 + $0x40] sm:$0xff]
  %v408 = vld [vmem:[#allocation3 + $0x48] sm:$0xff]
  %v409 = vld [vmem:[#allocation3 + $0x50] sm:$0xff]
  %v410 = vld [vmem:[#allocation3 + $0x58] sm:$0xff]
  %v411 = vld [vmem:[#allocation3 + $0x60] sm:$0xff]
  %v412 = vld [vmem:[#allocation3 + $0x68] sm:$0xff]
  %v413 = vld [vmem:[#allocation3 + $0x70] sm:$0xff]
  %v414 = vld [vmem:[#allocation3 + $0x78] sm:$0xff]
  %v415 = vld [vmem:[#allocation3 + $0x80] sm:$0xf]
  %v416 = vld [vmem:[#allocation3 + $0x88] sm:$0xf]
  %v417 = vld [vmem:[#allocation3 + $0x90] sm:$0xf]
  %v418 = vld [vmem:[#allocation3 + $0x98] sm:$0xf]
  %v419 = vld [vmem:[%s2] sm:$0xff]
  %421 = vset.pattern.permute.xlu0 0
  %422 = vperm.xlu0 %421, %v419
  %v423 = vpop.permute.xlu0 %422
  %vm425 = vcmask 293888
  %v427 = vsel %vm425, %v398, 0
  %vm429 = vcmask 1043456
  %v431 = vsel %vm429, %v415, 0
  %v434 = vsel %vm429, %v416, 0
  %v437 = vsel %vm429, %v417, 0
  %v440 = vsel %vm429, %v418, 0
  %v442 = vand.u32 %v400, 4294901760
  %443 = vmatprep.subr.mxu0 %v442
  %v444 = vand.u32 %v399, 4294901760
  %445 = vmatpush1.msra.mxu0 %v444
  %v446 = vand.u32 %v404, 4294901760
  %447 = vmatprep.subr.mxu0 %v446
  %v448 = vand.u32 %v403, 4294901760
  %449 = vmatpush1.msra.mxu0 %v448
  %v450 = vand.u32 %v408, 4294901760
  %451 = vmatprep.subr.mxu0 %v450
  %v452 = vand.u32 %v407, 4294901760
  %453 = vmatpush1.msra.mxu0 %v452
  %v454 = vand.u32 %v412, 4294901760
  %455 = vmatprep.subr.mxu0 %v454
  %v456 = vand.u32 %v411, 4294901760
  %457 = vmatpush1.msra.mxu0 %v456
  %v458 = vand.u32 %v434, 4294901760
  %459 = vmatprep.subr.mxu0 %v458
  %v460 = vand.u32 %v431, 4294901760
  %461 = vmatpush1.msra.mxu0 %v460
  %462 = vmatprep.subr.mxu0 0.0
  %463 = vmatpush1.msra.mxu0 0.0
  %464 = vmatprep.subr.mxu0 0.0
  %465 = vmatpush1.msra.mxu0 0.0
  %466 = vmatprep.subr.mxu0 0.0
  %467 = vmatpush1.msra.mxu0 0.0
  %468 = vmatprep.subr.mxu0 0.0
  %469 = vmatpush1.msra.mxu0 0.0
  %470 = vmatprep.subr.mxu0 0.0
  %471 = vmatpush1.msra.mxu0 0.0
  %472 = vmatprep.subr.mxu0 0.0
  %473 = vmatpush1.msra.mxu0 0.0
  %474 = vmatprep.subr.mxu0 0.0
  %475 = vmatpush1.msra.mxu0 0.0
  %476 = vmatprep.subr.mxu0 0.0
  %477 = vmatpush1.msra.mxu0 0.0
  %478 = vmatprep.subr.mxu0 0.0
  %479 = vmatpush1.msra.mxu0 0.0
  %480 = vmatprep.subr.mxu0 0.0
  %481 = vmatpush1.msra.mxu0 0.0
  %482 = vmatprep.subr.mxu0 0.0
  %483 = vmatpush1.msra.mxu0 0.0
  %484 = vmatprep.subr.mxu0 0.0
  %485 = vmatpush1.msra.mxu0 0.0
  %486 = vmatprep.subr.mxu0 0.0
  %487 = vmatpush1.msra.mxu0 0.0
  %488 = vmatprep.subr.mxu0 0.0
  %489 = vmatpush1.msra.mxu0 0.0
  %490 = vmatprep.subr.mxu0 0.0
  %491 = vmatpush1.msra.mxu0 0.0
  %492 = vmatprep.subr.mxu0 0.0
  %493 = vmatpush1.msra.mxu0 0.0
  %494 = vmatprep.subr.mxu0 0.0
  %495 = vmatpush1.msra.mxu0 0.0
  %496 = vmatprep.subr.mxu0 0.0
  %497 = vmatpush1.msra.mxu0 0.0
  %498 = vmatprep.subr.mxu0 0.0
  %499 = vmatpush1.msra.mxu0 0.0
  %500 = vmatprep.subr.mxu0 0.0
  %501 = vmatpush1.msra.mxu0 0.0
  %502 = vmatprep.subr.mxu0 0.0
  %503 = vmatpush1.msra.mxu0 0.0
  %504 = vmatprep.subr.mxu0 0.0
  %505 = vmatpush1.msra.mxu0 0.0
  %506 = vmatprep.subr.mxu0 0.0
  %507 = vmatpush1.msra.mxu0 0.0
  %508 = vmatprep.subr.mxu0 0.0
  %509 = vmatpush1.msra.mxu0 0.0
  %510 = vmatprep.subr.mxu0 0.0
  %511 = vmatpush1.msra.mxu0 0.0
  %512 = vmatprep.subr.mxu0 0.0
  %513 = vmatpush1.msra.mxu0 0.0
  %514 = vmatprep.subr.mxu0 0.0
  %515 = vmatpush1.msra.mxu0 0.0
  %516 = vmatprep.mubr.f32.mxu0 0.0
  %v517 = vand.u32 %v427, 4294901760
  %v518 = vsub.f32 %v427, %v517
  %v519 = vand.u32 %v518, 4294901760
  %v520 = vsub.f32 %v518, %v519
  %v521 = vand.u32 %v520, 4294901760
  %522 = vmatmul.mubr.f32.gmra.mrb[0].mxu0 %v521
  %v523 = vpop.f32.mrb[0].mxu0
  %v524 = vadd.f32 %v423, %v523
  %v525 = vpop.f32.mrb[0].mxu0
  %v526 = vadd.f32 %v423, %v525
  %527 = vdwg.mxu0
  %v528 = vand.u32 %v400, 4294901760
  %v529 = vsub.f32 %v400, %v528
  %v530 = vand.u32 %v529, 4294901760
  %v531 = vsub.f32 %v529, %v530
  %v532 = vand.u32 %v531, 4294901760
  %533 = vmatprep.subr.mxu0 %v532
  %v534 = vand.u32 %v399, 4294901760
  %v535 = vsub.f32 %v399, %v534
  %v536 = vand.u32 %v535, 4294901760
  %v537 = vsub.f32 %v535, %v536
  %v538 = vand.u32 %v537, 4294901760
  %539 = vmatpush1.msra.mxu0 %v538
  %v540 = vand.u32 %v404, 4294901760
  %v541 = vsub.f32 %v404, %v540
  %v542 = vand.u32 %v541, 4294901760
  %v543 = vsub.f32 %v541, %v542
  %v544 = vand.u32 %v543, 4294901760
  %545 = vmatprep.subr.mxu0 %v544
  %v546 = vand.u32 %v403, 4294901760
  %v547 = vsub.f32 %v403, %v546
  %v548 = vand.u32 %v547, 4294901760
  %v549 = vsub.f32 %v547, %v548
  %v550 = vand.u32 %v549, 4294901760
  %551 = vmatpush1.msra.mxu0 %v550
  %v552 = vand.u32 %v408, 4294901760
  %v553 = vsub.f32 %v408, %v552
  %v554 = vand.u32 %v553, 4294901760
  %v555 = vsub.f32 %v553, %v554
  %v556 = vand.u32 %v555, 4294901760
  %557 = vmatprep.subr.mxu0 %v556
  %v558 = vand.u32 %v407, 4294901760
  %v559 = vsub.f32 %v407, %v558
  %v560 = vand.u32 %v559, 4294901760
  %v561 = vsub.f32 %v559, %v560
  %v562 = vand.u32 %v561, 4294901760
  %563 = vmatpush1.msra.mxu0 %v562
  %v564 = vand.u32 %v412, 4294901760
  %v565 = vsub.f32 %v412, %v564
  %v566 = vand.u32 %v565, 4294901760
  %v567 = vsub.f32 %v565, %v566
  %v568 = vand.u32 %v567, 4294901760
  %569 = vmatprep.subr.mxu0 %v568
  %v570 = vand.u32 %v411, 4294901760
  %v571 = vsub.f32 %v411, %v570
  %v572 = vand.u32 %v571, 4294901760
  %v573 = vsub.f32 %v571, %v572
  %v574 = vand.u32 %v573, 4294901760
  %575 = vmatpush1.msra.mxu0 %v574
  %v576 = vand.u32 %v434, 4294901760
  %v577 = vsub.f32 %v434, %v576
  %v578 = vand.u32 %v577, 4294901760
  %v579 = vsub.f32 %v577, %v578
  %v580 = vand.u32 %v579, 4294901760
  %581 = vmatprep.subr.mxu0 %v580
  %v582 = vand.u32 %v431, 4294901760
  %v583 = vsub.f32 %v431, %v582
  %v584 = vand.u32 %v583, 4294901760
  %v585 = vsub.f32 %v583, %v584
  %v586 = vand.u32 %v585, 4294901760
  %587 = vmatpush1.msra.mxu0 %v586
  %588 = vmatprep.subr.mxu0 0.0
  %589 = vmatpush1.msra.mxu0 0.0
  %590 = vmatprep.subr.mxu0 0.0
  %591 = vmatpush1.msra.mxu0 0.0
  %592 = vmatprep.subr.mxu0 0.0
  %593 = vmatpush1.msra.mxu0 0.0
  %594 = vmatprep.subr.mxu0 0.0
  %595 = vmatpush1.msra.mxu0 0.0
  %596 = vmatprep.subr.mxu0 0.0
  %597 = vmatpush1.msra.mxu0 0.0
  %598 = vmatprep.subr.mxu0 0.0
  %599 = vmatpush1.msra.mxu0 0.0
  %600 = vmatprep.subr.mxu0 0.0
  %601 = vmatpush1.msra.mxu0 0.0
  %602 = vmatprep.subr.mxu0 0.0
  %603 = vmatpush1.msra.mxu0 0.0
  %604 = vmatprep.subr.mxu0 0.0
  %605 = vmatpush1.msra.mxu0 0.0
  %606 = vmatprep.subr.mxu0 0.0
  %607 = vmatpush1.msra.mxu0 0.0
  %608 = vmatprep.subr.mxu0 0.0
  %609 = vmatpush1.msra.mxu0 0.0
  %610 = vmatprep.subr.mxu0 0.0
  %611 = vmatpush1.msra.mxu0 0.0
  %612 = vmatprep.subr.mxu0 0.0
  %613 = vmatpush1.msra.mxu0 0.0
  %614 = vmatprep.subr.mxu0 0.0
  %615 = vmatpush1.msra.mxu0 0.0
  %616 = vmatprep.subr.mxu0 0.0
  %617 = vmatpush1.msra.mxu0 0.0
  %618 = vmatprep.subr.mxu0 0.0
  %619 = vmatpush1.msra.mxu0 0.0
  %620 = vmatprep.subr.mxu0 0.0
  %621 = vmatpush1.msra.mxu0 0.0
  %622 = vmatprep.subr.mxu0 0.0
  %623 = vmatpush1.msra.mxu0 0.0
  %624 = vmatprep.subr.mxu0 0.0
  %625 = vmatpush1.msra.mxu0 0.0
  %626 = vmatprep.subr.mxu0 0.0
  %627 = vmatpush1.msra.mxu0 0.0
  %628 = vmatprep.subr.mxu0 0.0
  %629 = vmatpush1.msra.mxu0 0.0
  %630 = vmatprep.subr.mxu0 0.0
  %631 = vmatpush1.msra.mxu0 0.0
  %632 = vmatprep.subr.mxu0 0.0
  %633 = vmatpush1.msra.mxu0 0.0
  %634 = vmatprep.subr.mxu0 0.0
  %635 = vmatpush1.msra.mxu0 0.0
  %636 = vmatprep.subr.mxu0 0.0
  %637 = vmatpush1.msra.mxu0 0.0
  %638 = vmatprep.subr.mxu0 0.0
  %639 = vmatpush1.msra.mxu0 0.0
  %640 = vmatprep.subr.mxu0 0.0
  %641 = vmatpush1.msra.mxu0 0.0
  %642 = vmatprep.mubr.f32.mxu0 0.0
  %v643 = vand.u32 %v427, 4294901760
  %644 = vmatmul.mubr.f32.gmra.mrb[0].mxu0 %v643
  %v645 = vpop.f32.mrb[0].mxu0
  %v646 = vadd.f32 %v524, %v645
  %v647 = vpop.f32.mrb[0].mxu0
  %v648 = vadd.f32 %v526, %v647
  %649 = vdwg.mxu0
  %v650 = vand.u32 %v400, 4294901760
  %v651 = vsub.f32 %v400, %v650
  %652 = vmatprep.subr.mxu0 %v651
  %v653 = vand.u32 %v399, 4294901760
  %v654 = vsub.f32 %v399, %v653
  %655 = vmatpush1.msra.mxu0 %v654
  %v656 = vand.u32 %v404, 4294901760
  %v657 = vsub.f32 %v404, %v656
  %658 = vmatprep.subr.mxu0 %v657
  %v659 = vand.u32 %v403, 4294901760
  %v660 = vsub.f32 %v403, %v659
  %661 = vmatpush1.msra.mxu0 %v660
  %v662 = vand.u32 %v408, 4294901760
  %v663 = vsub.f32 %v408, %v662
  %664 = vmatprep.subr.mxu0 %v663
  %v665 = vand.u32 %v407, 4294901760
  %v666 = vsub.f32 %v407, %v665
  %667 = vmatpush1.msra.mxu0 %v666
  %v668 = vand.u32 %v412, 4294901760
  %v669 = vsub.f32 %v412, %v668
  %670 = vmatprep.subr.mxu0 %v669
  %v671 = vand.u32 %v411, 4294901760
  %v672 = vsub.f32 %v411, %v671
  %673 = vmatpush1.msra.mxu0 %v672
  %v674 = vand.u32 %v434, 4294901760
  %v675 = vsub.f32 %v434, %v674
  %676 = vmatprep.subr.mxu0 %v675
  %v677 = vand.u32 %v431, 4294901760
  %v678 = vsub.f32 %v431, %v677
  %679 = vmatpush1.msra.mxu0 %v678
  %680 = vmatprep.subr.mxu0 0.0
  %681 = vmatpush1.msra.mxu0 0.0
  %682 = vmatprep.subr.mxu0 0.0
  %683 = vmatpush1.msra.mxu0 0.0
  %684 = vmatprep.subr.mxu0 0.0
  %685 = vmatpush1.msra.mxu0 0.0
  %686 = vmatprep.subr.mxu0 0.0
  %687 = vmatpush1.msra.mxu0 0.0
  %688 = vmatprep.subr.mxu0 0.0
  %689 = vmatpush1.msra.mxu0 0.0
  %690 = vmatprep.subr.mxu0 0.0
  %691 = vmatpush1.msra.mxu0 0.0
  %692 = vmatprep.subr.mxu0 0.0
  %693 = vmatpush1.msra.mxu0 0.0
  %694 = vmatprep.subr.mxu0 0.0
  %695 = vmatpush1.msra.mxu0 0.0
  %696 = vmatprep.subr.mxu0 0.0
  %697 = vmatpush1.msra.mxu0 0.0
  %698 = vmatprep.subr.mxu0 0.0
  %699 = vmatpush1.msra.mxu0 0.0
  %700 = vmatprep.subr.mxu0 0.0
  %701 = vmatpush1.msra.mxu0 0.0
  %702 = vmatprep.subr.mxu0 0.0
  %703 = vmatpush1.msra.mxu0 0.0
  %704 = vmatprep.subr.mxu0 0.0
  %705 = vmatpush1.msra.mxu0 0.0
  %706 = vmatprep.subr.mxu0 0.0
  %707 = vmatpush1.msra.mxu0 0.0
  %708 = vmatprep.subr.mxu0 0.0
  %709 = vmatpush1.msra.mxu0 0.0
  %710 = vmatprep.subr.mxu0 0.0
  %711 = vmatpush1.msra.mxu0 0.0
  %712 = vmatprep.subr.mxu0 0.0
  %713 = vmatpush1.msra.mxu0 0.0
  %714 = vmatprep.subr.mxu0 0.0
  %715 = vmatpush1.msra.mxu0 0.0
  %716 = vmatprep.subr.mxu0 0.0
  %717 = vmatpush1.msra.mxu0 0.0
  %718 = vmatprep.subr.mxu0 0.0
  %719 = vmatpush1.msra.mxu0 0.0
  %720 = vmatprep.subr.mxu0 0.0
  %721 = vmatpush1.msra.mxu0 0.0
  %722 = vmatprep.subr.mxu0 0.0
  %723 = vmatpush1.msra.mxu0 0.0
  %724 = vmatprep.subr.mxu0 0.0
  %725 = vmatpush1.msra.mxu0 0.0
  %726 = vmatprep.subr.mxu0 0.0
  %727 = vmatpush1.msra.mxu0 0.0
  %728 = vmatprep.subr.mxu0 0.0
  %729 = vmatpush1.msra.mxu0 0.0
  %730 = vmatprep.subr.mxu0 0.0
  %731 = vmatpush1.msra.mxu0 0.0
  %732 = vmatprep.subr.mxu0 0.0
  %733 = vmatpush1.msra.mxu0 0.0
  %734 = vmatprep.mubr.f32.mxu0 0.0
  %v735 = vand.u32 %v427, 4294901760
  %v736 = vsub.f32 %v427, %v735
  %737 = vmatmul.mubr.f32.gmra.mrb[0].mxu0 %v736
  %v738 = vpop.f32.mrb[0].mxu0
  %v739 = vadd.f32 %v646, %v738
  %v740 = vpop.f32.mrb[0].mxu0
  %v741 = vadd.f32 %v648, %v740
  %742 = vdwg.mxu0
  %v743 = vand.u32 %v400, 4294901760
  %744 = vmatprep.subr.mxu0 %v743
  %v745 = vand.u32 %v399, 4294901760
  %746 = vmatpush1.msra.mxu0 %v745
  %v747 = vand.u32 %v404, 4294901760
  %748 = vmatprep.subr.mxu0 %v747
  %v749 = vand.u32 %v403, 4294901760
  %750 = vmatpush1.msra.mxu0 %v749
  %v751 = vand.u32 %v408, 4294901760
  %752 = vmatprep.subr.mxu0 %v751
  %v753 = vand.u32 %v407, 4294901760
  %754 = vmatpush1.msra.mxu0 %v753
  %v755 = vand.u32 %v412, 4294901760
  %756 = vmatprep.subr.mxu0 %v755
  %v757 = vand.u32 %v411, 4294901760
  %758 = vmatpush1.msra.mxu0 %v757
  %v759 = vand.u32 %v434, 4294901760
  %760 = vmatprep.subr.mxu0 %v759
  %v761 = vand.u32 %v431, 4294901760
  %762 = vmatpush1.msra.mxu0 %v761
  %763 = vmatprep.subr.mxu0 0.0
  %764 = vmatpush1.msra.mxu0 0.0
  %765 = vmatprep.subr.mxu0 0.0
  %766 = vmatpush1.msra.mxu0 0.0
  %767 = vmatprep.subr.mxu0 0.0
  %768 = vmatpush1.msra.mxu0 0.0
  %769 = vmatprep.subr.mxu0 0.0
  %770 = vmatpush1.msra.mxu0 0.0
  %771 = vmatprep.subr.mxu0 0.0
  %772 = vmatpush1.msra.mxu0 0.0
  %773 = vmatprep.subr.mxu0 0.0
  %774 = vmatpush1.msra.mxu0 0.0
  %775 = vmatprep.subr.mxu0 0.0
  %776 = vmatpush1.msra.mxu0 0.0
  %777 = vmatprep.subr.mxu0 0.0
  %778 = vmatpush1.msra.mxu0 0.0
  %779 = vmatprep.subr.mxu0 0.0
  %780 = vmatpush1.msra.mxu0 0.0
  %781 = vmatprep.subr.mxu0 0.0
  %782 = vmatpush1.msra.mxu0 0.0
  %783 = vmatprep.subr.mxu0 0.0
  %784 = vmatpush1.msra.mxu0 0.0
  %785 = vmatprep.subr.mxu0 0.0
  %786 = vmatpush1.msra.mxu0 0.0
  %787 = vmatprep.subr.mxu0 0.0
  %788 = vmatpush1.msra.mxu0 0.0
  %789 = vmatprep.subr.mxu0 0.0
  %790 = vmatpush1.msra.mxu0 0.0
  %791 = vmatprep.subr.mxu0 0.0
  %792 = vmatpush1.msra.mxu0 0.0
  %793 = vmatprep.subr.mxu0 0.0
  %794 = vmatpush1.msra.mxu0 0.0
  %795 = vmatprep.subr.mxu0 0.0
  %796 = vmatpush1.msra.mxu0 0.0
  %797 = vmatprep.subr.mxu0 0.0
  %798 = vmatpush1.msra.mxu0 0.0
  %799 = vmatprep.subr.mxu0 0.0
  %800 = vmatpush1.msra.mxu0 0.0
  %801 = vmatprep.subr.mxu0 0.0
  %802 = vmatpush1.msra.mxu0 0.0
  %803 = vmatprep.subr.mxu0 0.0
  %804 = vmatpush1.msra.mxu0 0.0
  %805 = vmatprep.subr.mxu0 0.0
  %806 = vmatpush1.msra.mxu0 0.0
  %807 = vmatprep.subr.mxu0 0.0
  %808 = vmatpush1.msra.mxu0 0.0
  %809 = vmatprep.subr.mxu0 0.0
  %810 = vmatpush1.msra.mxu0 0.0
  %811 = vmatprep.subr.mxu0 0.0
  %812 = vmatpush1.msra.mxu0 0.0
  %813 = vmatprep.subr.mxu0 0.0
  %814 = vmatpush1.msra.mxu0 0.0
  %815 = vmatprep.subr.mxu0 0.0
  %816 = vmatpush1.msra.mxu0 0.0
  %817 = vmatprep.mubr.f32.mxu0 0.0
  %v818 = vand.u32 %v427, 4294901760
  %v819 = vsub.f32 %v427, %v818
  %v820 = vand.u32 %v819, 4294901760
  %821 = vmatmul.mubr.f32.gmra.mrb[0].mxu0 %v820
  %v822 = vpop.f32.mrb[0].mxu0
  %v823 = vadd.f32 %v739, %v822
  %v824 = vpop.f32.mrb[0].mxu0
  %v825 = vadd.f32 %v741, %v824
  %826 = vdwg.mxu0
  %v827 = vand.u32 %v400, 4294901760
  %v828 = vsub.f32 %v400, %v827
  %v829 = vand.u32 %v828, 4294901760
  %830 = vmatprep.subr.mxu0 %v829
  %v831 = vand.u32 %v399, 4294901760
  %v832 = vsub.f32 %v399, %v831
  %v833 = vand.u32 %v832, 4294901760
  %834 = vmatpush1.msra.mxu0 %v833
  %v835 = vand.u32 %v404, 4294901760
  %v836 = vsub.f32 %v404, %v835
  %v837 = vand.u32 %v836, 4294901760
  %838 = vmatprep.subr.mxu0 %v837
  %v839 = vand.u32 %v403, 4294901760
  %v840 = vsub.f32 %v403, %v839
  %v841 = vand.u32 %v840, 4294901760
  %842 = vmatpush1.msra.mxu0 %v841
  %v843 = vand.u32 %v408, 4294901760
  %v844 = vsub.f32 %v408, %v843
  %v845 = vand.u32 %v844, 4294901760
  %846 = vmatprep.subr.mxu0 %v845
  %v847 = vand.u32 %v407, 4294901760
  %v848 = vsub.f32 %v407, %v847
  %v849 = vand.u32 %v848, 4294901760
  %850 = vmatpush1.msra.mxu0 %v849
  %v851 = vand.u32 %v412, 4294901760
  %v852 = vsub.f32 %v412, %v851
  %v853 = vand.u32 %v852, 4294901760
  %854 = vmatprep.subr.mxu0 %v853
  %v855 = vand.u32 %v411, 4294901760
  %v856 = vsub.f32 %v411, %v855
  %v857 = vand.u32 %v856, 4294901760
  %858 = vmatpush1.msra.mxu0 %v857
  %v859 = vand.u32 %v434, 4294901760
  %v860 = vsub.f32 %v434, %v859
  %v861 = vand.u32 %v860, 4294901760
  %862 = vmatprep.subr.mxu0 %v861
  %v863 = vand.u32 %v431, 4294901760
  %v864 = vsub.f32 %v431, %v863
  %v865 = vand.u32 %v864, 4294901760
  %866 = vmatpush1.msra.mxu0 %v865
  %867 = vmatprep.subr.mxu0 0.0
  %868 = vmatpush1.msra.mxu0 0.0
  %869 = vmatprep.subr.mxu0 0.0
  %870 = vmatpush1.msra.mxu0 0.0
  %871 = vmatprep.subr.mxu0 0.0
  %872 = vmatpush1.msra.mxu0 0.0
  %873 = vmatprep.subr.mxu0 0.0
  %874 = vmatpush1.msra.mxu0 0.0
  %875 = vmatprep.subr.mxu0 0.0
  %876 = vmatpush1.msra.mxu0 0.0
  %877 = vmatprep.subr.mxu0 0.0
  %878 = vmatpush1.msra.mxu0 0.0
  %879 = vmatprep.subr.mxu0 0.0
  %880 = vmatpush1.msra.mxu0 0.0
  %881 = vmatprep.subr.mxu0 0.0
  %882 = vmatpush1.msra.mxu0 0.0
  %883 = vmatprep.subr.mxu0 0.0
  %884 = vmatpush1.msra.mxu0 0.0
  %885 = vmatprep.subr.mxu0 0.0
  %886 = vmatpush1.msra.mxu0 0.0
  %887 = vmatprep.subr.mxu0 0.0
  %888 = vmatpush1.msra.mxu0 0.0
  %889 = vmatprep.subr.mxu0 0.0
  %890 = vmatpush1.msra.mxu0 0.0
  %891 = vmatprep.subr.mxu0 0.0
  %892 = vmatpush1.msra.mxu0 0.0
  %893 = vmatprep.subr.mxu0 0.0
  %894 = vmatpush1.msra.mxu0 0.0
  %895 = vmatprep.subr.mxu0 0.0
  %896 = vmatpush1.msra.mxu0 0.0
  %897 = vmatprep.subr.mxu0 0.0
  %898 = vmatpush1.msra.mxu0 0.0
  %899 = vmatprep.subr.mxu0 0.0
  %900 = vmatpush1.msra.mxu0 0.0
  %901 = vmatprep.subr.mxu0 0.0
  %902 = vmatpush1.msra.mxu0 0.0
  %903 = vmatprep.subr.mxu0 0.0
  %904 = vmatpush1.msra.mxu0 0.0
  %905 = vmatprep.subr.mxu0 0.0
  %906 = vmatpush1.msra.mxu0 0.0
  %907 = vmatprep.subr.mxu0 0.0
  %908 = vmatpush1.msra.mxu0 0.0
  %909 = vmatprep.subr.mxu0 0.0
  %910 = vmatpush1.msra.mxu0 0.0
  %911 = vmatprep.subr.mxu0 0.0
  %912 = vmatpush1.msra.mxu0 0.0
  %913 = vmatprep.subr.mxu0 0.0
  %914 = vmatpush1.msra.mxu0 0.0
  %915 = vmatprep.subr.mxu0 0.0
  %916 = vmatpush1.msra.mxu0 0.0
  %917 = vmatprep.subr.mxu0 0.0
  %918 = vmatpush1.msra.mxu0 0.0
  %919 = vmatprep.subr.mxu0 0.0
  %920 = vmatpush1.msra.mxu0 0.0
  %921 = vmatprep.mubr.f32.mxu0 0.0
  %v922 = vand.u32 %v427, 4294901760
  %923 = vmatmul.mubr.f32.gmra.mrb[0].mxu0 %v922
  %v924 = vpop.f32.mrb[0].mxu0
  %v925 = vadd.f32 %v823, %v924
  %v926 = vpop.f32.mrb[0].mxu0
  %v927 = vadd.f32 %v825, %v926
  %928 = vdwg.mxu0
  %v929 = vand.u32 %v400, 4294901760
  %930 = vmatprep.subr.mxu0 %v929
  %v931 = vand.u32 %v399, 4294901760
  %932 = vmatpush1.msra.mxu0 %v931
  %v933 = vand.u32 %v404, 4294901760
  %934 = vmatprep.subr.mxu0 %v933
  %v935 = vand.u32 %v403, 4294901760
  %936 = vmatpush1.msra.mxu0 %v935
  %v937 = vand.u32 %v408, 4294901760
  %938 = vmatprep.subr.mxu0 %v937
  %v939 = vand.u32 %v407, 4294901760
  %940 = vmatpush1.msra.mxu0 %v939
  %v941 = vand.u32 %v412, 4294901760
  %942 = vmatprep.subr.mxu0 %v941
  %v943 = vand.u32 %v411, 4294901760
  %944 = vmatpush1.msra.mxu0 %v943
  %v945 = vand.u32 %v434, 4294901760
  %946 = vmatprep.subr.mxu0 %v945
  %v947 = vand.u32 %v431, 4294901760
  %948 = vmatpush1.msra.mxu0 %v947
  %949 = vmatprep.subr.mxu0 0.0
  %950 = vmatpush1.msra.mxu0 0.0
  %951 = vmatprep.subr.mxu0 0.0
  %952 = vmatpush1.msra.mxu0 0.0
  %953 = vmatprep.subr.mxu0 0.0
  %954 = vmatpush1.msra.mxu0 0.0
  %955 = vmatprep.subr.mxu0 0.0
  %956 = vmatpush1.msra.mxu0 0.0
  %957 = vmatprep.subr.mxu0 0.0
  %958 = vmatpush1.msra.mxu0 0.0
  %959 = vmatprep.subr.mxu0 0.0
  %960 = vmatpush1.msra.mxu0 0.0
  %961 = vmatprep.subr.mxu0 0.0
  %962 = vmatpush1.msra.mxu0 0.0
  %963 = vmatprep.subr.mxu0 0.0
  %964 = vmatpush1.msra.mxu0 0.0
  %965 = vmatprep.subr.mxu0 0.0
  %966 = vmatpush1.msra.mxu0 0.0
  %967 = vmatprep.subr.mxu0 0.0
  %968 = vmatpush1.msra.mxu0 0.0
  %969 = vmatprep.subr.mxu0 0.0
  %970 = vmatpush1.msra.mxu0 0.0
  %971 = vmatprep.subr.mxu0 0.0
  %972 = vmatpush1.msra.mxu0 0.0
  %973 = vmatprep.subr.mxu0 0.0
  %974 = vmatpush1.msra.mxu0 0.0
  %975 = vmatprep.subr.mxu0 0.0
  %976 = vmatpush1.msra.mxu0 0.0
  %977 = vmatprep.subr.mxu0 0.0
  %978 = vmatpush1.msra.mxu0 0.0
  %979 = vmatprep.subr.mxu0 0.0
  %980 = vmatpush1.msra.mxu0 0.0
  %981 = vmatprep.subr.mxu0 0.0
  %982 = vmatpush1.msra.mxu0 0.0
  %983 = vmatprep.subr.mxu0 0.0
  %984 = vmatpush1.msra.mxu0 0.0
  %985 = vmatprep.subr.mxu0 0.0
  %986 = vmatpush1.msra.mxu0 0.0
  %987 = vmatprep.subr.mxu0 0.0
  %988 = vmatpush1.msra.mxu0 0.0
  %989 = vmatprep.subr.mxu0 0.0
  %990 = vmatpush1.msra.mxu0 0.0
  %991 = vmatprep.subr.mxu0 0.0
  %992 = vmatpush1.msra.mxu0 0.0
  %993 = vmatprep.subr.mxu0 0.0
  %994 = vmatpush1.msra.mxu0 0.0
  %995 = vmatprep.subr.mxu0 0.0
  %996 = vmatpush1.msra.mxu0 0.0
  %997 = vmatprep.subr.mxu0 0.0
  %998 = vmatpush1.msra.mxu0 0.0
  %999 = vmatprep.subr.mxu0 0.0
  %1000 = vmatpush1.msra.mxu0 0.0
  %1001 = vmatprep.subr.mxu0 0.0
  %1002 = vmatpush1.msra.mxu0 0.0
  %1003 = vmatprep.mubr.f32.mxu0 0.0
  %v1004 = vand.u32 %v427, 4294901760
  %1005 = vmatmul.mubr.f32.gmra.mrb[0].mxu0 %v1004
  %v1006 = vpop.f32.mrb[0].mxu0
  %v1007 = vadd.f32 %v925, %v1006
  %v1008 = vpop.f32.mrb[0].mxu0
  %v1009 = vadd.f32 %v927, %v1008
  %1010 = vdwg.mxu0
  %v1011 = vand.u32 %v402, 4294901760
  %1012 = vmatprep.subr.mxu0 %v1011
  %v1013 = vand.u32 %v401, 4294901760
  %1014 = vmatpush1.msra.mxu0 %v1013
  %v1015 = vand.u32 %v406, 4294901760
  %1016 = vmatprep.subr.mxu0 %v1015
  %v1017 = vand.u32 %v405, 4294901760
  %1018 = vmatpush1.msra.mxu0 %v1017
  %v1019 = vand.u32 %v410, 4294901760
  %1020 = vmatprep.subr.mxu0 %v1019
  %v1021 = vand.u32 %v409, 4294901760
  %1022 = vmatpush1.msra.mxu0 %v1021
  %v1023 = vand.u32 %v414, 4294901760
  %1024 = vmatprep.subr.mxu0 %v1023
  %v1025 = vand.u32 %v413, 4294901760
  %1026 = vmatpush1.msra.mxu0 %v1025
  %v1027 = vand.u32 %v440, 4294901760
  %1028 = vmatprep.subr.mxu0 %v1027
  %v1029 = vand.u32 %v437, 4294901760
  %1030 = vmatpush1.msra.mxu0 %v1029
  %1031 = vmatprep.subr.mxu0 0.0
  %1032 = vmatpush1.msra.mxu0 0.0
  %1033 = vmatprep.subr.mxu0 0.0
  %1034 = vmatpush1.msra.mxu0 0.0
  %1035 = vmatprep.subr.mxu0 0.0
  %1036 = vmatpush1.msra.mxu0 0.0
  %1037 = vmatprep.subr.mxu0 0.0
  %1038 = vmatpush1.msra.mxu0 0.0
  %1039 = vmatprep.subr.mxu0 0.0
  %1040 = vmatpush1.msra.mxu0 0.0
  %1041 = vmatprep.subr.mxu0 0.0
  %1042 = vmatpush1.msra.mxu0 0.0
  %1043 = vmatprep.subr.mxu0 0.0
  %1044 = vmatpush1.msra.mxu0 0.0
  %1045 = vmatprep.subr.mxu0 0.0
  %1046 = vmatpush1.msra.mxu0 0.0
  %1047 = vmatprep.subr.mxu0 0.0
  %1048 = vmatpush1.msra.mxu0 0.0
  %1049 = vmatprep.subr.mxu0 0.0
  %1050 = vmatpush1.msra.mxu0 0.0
  %1051 = vmatprep.subr.mxu0 0.0
  %1052 = vmatpush1.msra.mxu0 0.0
  %1053 = vmatprep.subr.mxu0 0.0
  %1054 = vmatpush1.msra.mxu0 0.0
  %1055 = vmatprep.subr.mxu0 0.0
  %1056 = vmatpush1.msra.mxu0 0.0
  %1057 = vmatprep.subr.mxu0 0.0
  %1058 = vmatpush1.msra.mxu0 0.0
  %1059 = vmatprep.subr.mxu0 0.0
  %1060 = vmatpush1.msra.mxu0 0.0
  %1061 = vmatprep.subr.mxu0 0.0
  %1062 = vmatpush1.msra.mxu0 0.0
  %1063 = vmatprep.subr.mxu0 0.0
  %1064 = vmatpush1.msra.mxu0 0.0
  %1065 = vmatprep.subr.mxu0 0.0
  %1066 = vmatpush1.msra.mxu0 0.0
  %1067 = vmatprep.subr.mxu0 0.0
  %1068 = vmatpush1.msra.mxu0 0.0
  %1069 = vmatprep.subr.mxu0 0.0
  %1070 = vmatpush1.msra.mxu0 0.0
  %1071 = vmatprep.subr.mxu0 0.0
  %1072 = vmatpush1.msra.mxu0 0.0
  %1073 = vmatprep.subr.mxu0 0.0
  %1074 = vmatpush1.msra.mxu0 0.0
  %1075 = vmatprep.subr.mxu0 0.0
  %1076 = vmatpush1.msra.mxu0 0.0
  %1077 = vmatprep.subr.mxu0 0.0
  %1078 = vmatpush1.msra.mxu0 0.0
  %1079 = vmatprep.subr.mxu0 0.0
  %1080 = vmatpush1.msra.mxu0 0.0
  %1081 = vmatprep.subr.mxu0 0.0
  %1082 = vmatpush1.msra.mxu0 0.0
  %1083 = vmatprep.subr.mxu0 0.0
  %1084 = vmatpush1.msra.mxu0 0.0
  %1085 = vmatprep.mubr.f32.mxu0 0.0
  %v1086 = vand.u32 %v427, 4294901760
  %v1087 = vsub.f32 %v427, %v1086
  %v1088 = vand.u32 %v1087, 4294901760
  %v1089 = vsub.f32 %v1087, %v1088
  %v1090 = vand.u32 %v1089, 4294901760
  %1091 = vmatmul.mubr.f32.gmra.mrb[0].mxu0 %v1090
  %v1092 = vpop.f32.mrb[0].mxu0
  %v1093 = vadd.f32 %v423, %v1092
  %v1094 = vpop.f32.mrb[0].mxu0
  %v1095 = vadd.f32 %v423, %v1094
  %1096 = vdwg.mxu0
  %v1097 = vand.u32 %v402, 4294901760
  %v1098 = vsub.f32 %v402, %v1097
  %v1099 = vand.u32 %v1098, 4294901760
  %v1100 = vsub.f32 %v1098, %v1099
  %v1101 = vand.u32 %v1100, 4294901760
  %1102 = vmatprep.subr.mxu0 %v1101
  %v1103 = vand.u32 %v401, 4294901760
  %v1104 = vsub.f32 %v401, %v1103
  %v1105 = vand.u32 %v1104, 4294901760
  %v1106 = vsub.f32 %v1104, %v1105
  %v1107 = vand.u32 %v1106, 4294901760
  %1108 = vmatpush1.msra.mxu0 %v1107
  %v1109 = vand.u32 %v406, 4294901760
  %v1110 = vsub.f32 %v406, %v1109
  %v1111 = vand.u32 %v1110, 4294901760
  %v1112 = vsub.f32 %v1110, %v1111
  %v1113 = vand.u32 %v1112, 4294901760
  %1114 = vmatprep.subr.mxu0 %v1113
  %v1115 = vand.u32 %v405, 4294901760
  %v1116 = vsub.f32 %v405, %v1115
  %v1117 = vand.u32 %v1116, 4294901760
  %v1118 = vsub.f32 %v1116, %v1117
  %v1119 = vand.u32 %v1118, 4294901760
  %1120 = vmatpush1.msra.mxu0 %v1119
  %v1121 = vand.u32 %v410, 4294901760
  %v1122 = vsub.f32 %v410, %v1121
  %v1123 = vand.u32 %v1122, 4294901760
  %v1124 = vsub.f32 %v1122, %v1123
  %v1125 = vand.u32 %v1124, 4294901760
  %1126 = vmatprep.subr.mxu0 %v1125
  %v1127 = vand.u32 %v409, 4294901760
  %v1128 = vsub.f32 %v409, %v1127
  %v1129 = vand.u32 %v1128, 4294901760
  %v1130 = vsub.f32 %v1128, %v1129
  %v1131 = vand.u32 %v1130, 4294901760
  %1132 = vmatpush1.msra.mxu0 %v1131
  %v1133 = vand.u32 %v414, 4294901760
  %v1134 = vsub.f32 %v414, %v1133
  %v1135 = vand.u32 %v1134, 4294901760
  %v1136 = vsub.f32 %v1134, %v1135
  %v1137 = vand.u32 %v1136, 4294901760
  %1138 = vmatprep.subr.mxu0 %v1137
  %v1139 = vand.u32 %v413, 4294901760
  %v1140 = vsub.f32 %v413, %v1139
  %v1141 = vand.u32 %v1140, 4294901760
  %v1142 = vsub.f32 %v1140, %v1141
  %v1143 = vand.u32 %v1142, 4294901760
  %1144 = vmatpush1.msra.mxu0 %v1143
  %v1145 = vand.u32 %v440, 4294901760
  %v1146 = vsub.f32 %v440, %v1145
  %v1147 = vand.u32 %v1146, 4294901760
  %v1148 = vsub.f32 %v1146, %v1147
  %v1149 = vand.u32 %v1148, 4294901760
  %1150 = vmatprep.subr.mxu0 %v1149
  %v1151 = vand.u32 %v437, 4294901760
  %v1152 = vsub.f32 %v437, %v1151
  %v1153 = vand.u32 %v1152, 4294901760
  %v1154 = vsub.f32 %v1152, %v1153
  %v1155 = vand.u32 %v1154, 4294901760
  %1156 = vmatpush1.msra.mxu0 %v1155
  %1157 = vmatprep.subr.mxu0 0.0
  %1158 = vmatpush1.msra.mxu0 0.0
  %1159 = vmatprep.subr.mxu0 0.0
  %1160 = vmatpush1.msra.mxu0 0.0
  %1161 = vmatprep.subr.mxu0 0.0
  %1162 = vmatpush1.msra.mxu0 0.0
  %1163 = vmatprep.subr.mxu0 0.0
  %1164 = vmatpush1.msra.mxu0 0.0
  %1165 = vmatprep.subr.mxu0 0.0
  %1166 = vmatpush1.msra.mxu0 0.0
  %1167 = vmatprep.subr.mxu0 0.0
  %1168 = vmatpush1.msra.mxu0 0.0
  %1169 = vmatprep.subr.mxu0 0.0
  %1170 = vmatpush1.msra.mxu0 0.0
  %1171 = vmatprep.subr.mxu0 0.0
  %1172 = vmatpush1.msra.mxu0 0.0
  %1173 = vmatprep.subr.mxu0 0.0
  %1174 = vmatpush1.msra.mxu0 0.0
  %1175 = vmatprep.subr.mxu0 0.0
  %1176 = vmatpush1.msra.mxu0 0.0
  %1177 = vmatprep.subr.mxu0 0.0
  %1178 = vmatpush1.msra.mxu0 0.0
  %1179 = vmatprep.subr.mxu0 0.0
  %1180 = vmatpush1.msra.mxu0 0.0
  %1181 = vmatprep.subr.mxu0 0.0
  %1182 = vmatpush1.msra.mxu0 0.0
  %1183 = vmatprep.subr.mxu0 0.0
  %1184 = vmatpush1.msra.mxu0 0.0
  %1185 = vmatprep.subr.mxu0 0.0
  %1186 = vmatpush1.msra.mxu0 0.0
  %1187 = vmatprep.subr.mxu0 0.0
  %1188 = vmatpush1.msra.mxu0 0.0
  %1189 = vmatprep.subr.mxu0 0.0
  %1190 = vmatpush1.msra.mxu0 0.0
  %1191 = vmatprep.subr.mxu0 0.0
  %1192 = vmatpush1.msra.mxu0 0.0
  %1193 = vmatprep.subr.mxu0 0.0
  %1194 = vmatpush1.msra.mxu0 0.0
  %1195 = vmatprep.subr.mxu0 0.0
  %1196 = vmatpush1.msra.mxu0 0.0
  %1197 = vmatprep.subr.mxu0 0.0
  %1198 = vmatpush1.msra.mxu0 0.0
  %1199 = vmatprep.subr.mxu0 0.0
  %1200 = vmatpush1.msra.mxu0 0.0
  %1201 = vmatprep.subr.mxu0 0.0
  %1202 = vmatpush1.msra.mxu0 0.0
  %1203 = vmatprep.subr.mxu0 0.0
  %1204 = vmatpush1.msra.mxu0 0.0
  %1205 = vmatprep.subr.mxu0 0.0
  %1206 = vmatpush1.msra.mxu0 0.0
  %1207 = vmatprep.subr.mxu0 0.0
  %1208 = vmatpush1.msra.mxu0 0.0
  %1209 = vmatprep.subr.mxu0 0.0
  %1210 = vmatpush1.msra.mxu0 0.0
  %1211 = vmatprep.mubr.f32.mxu0 0.0
  %v1212 = vand.u32 %v427, 4294901760
  %1213 = vmatmul.mubr.f32.gmra.mrb[0].mxu0 %v1212
  %v1214 = vpop.f32.mrb[0].mxu0
  %v1215 = vadd.f32 %v1093, %v1214
  %v1216 = vpop.f32.mrb[0].mxu0
  %v1217 = vadd.f32 %v1095, %v1216
  %1218 = vdwg.mxu0
  %v1219 = vand.u32 %v402, 4294901760
  %v1220 = vsub.f32 %v402, %v1219
  %1221 = vmatprep.subr.mxu0 %v1220
  %v1222 = vand.u32 %v401, 4294901760
  %v1223 = vsub.f32 %v401, %v1222
  %1224 = vmatpush1.msra.mxu0 %v1223
  %v1225 = vand.u32 %v406, 4294901760
  %v1226 = vsub.f32 %v406, %v1225
  %1227 = vmatprep.subr.mxu0 %v1226
  %v1228 = vand.u32 %v405, 4294901760
  %v1229 = vsub.f32 %v405, %v1228
  %1230 = vmatpush1.msra.mxu0 %v1229
  %v1231 = vand.u32 %v410, 4294901760
  %v1232 = vsub.f32 %v410, %v1231
  %1233 = vmatprep.subr.mxu0 %v1232
  %v1234 = vand.u32 %v409, 4294901760
  %v1235 = vsub.f32 %v409, %v1234
  %1236 = vmatpush1.msra.mxu0 %v1235
  %v1237 = vand.u32 %v414, 4294901760
  %v1238 = vsub.f32 %v414, %v1237
  %1239 = vmatprep.subr.mxu0 %v1238
  %v1240 = vand.u32 %v413, 4294901760
  %v1241 = vsub.f32 %v413, %v1240
  %1242 = vmatpush1.msra.mxu0 %v1241
  %v1243 = vand.u32 %v440, 4294901760
  %v1244 = vsub.f32 %v440, %v1243
  %1245 = vmatprep.subr.mxu0 %v1244
  %v1246 = vand.u32 %v437, 4294901760
  %v1247 = vsub.f32 %v437, %v1246
  %1248 = vmatpush1.msra.mxu0 %v1247
  %1249 = vmatprep.subr.mxu0 0.0
  %1250 = vmatpush1.msra.mxu0 0.0
  %1251 = vmatprep.subr.mxu0 0.0
  %1252 = vmatpush1.msra.mxu0 0.0
  %1253 = vmatprep.subr.mxu0 0.0
  %1254 = vmatpush1.msra.mxu0 0.0
  %1255 = vmatprep.subr.mxu0 0.0
  %1256 = vmatpush1.msra.mxu0 0.0
  %1257 = vmatprep.subr.mxu0 0.0
  %1258 = vmatpush1.msra.mxu0 0.0
  %1259 = vmatprep.subr.mxu0 0.0
  %1260 = vmatpush1.msra.mxu0 0.0
  %1261 = vmatprep.subr.mxu0 0.0
  %1262 = vmatpush1.msra.mxu0 0.0
  %1263 = vmatprep.subr.mxu0 0.0
  %1264 = vmatpush1.msra.mxu0 0.0
  %1265 = vmatprep.subr.mxu0 0.0
  %1266 = vmatpush1.msra.mxu0 0.0
  %1267 = vmatprep.subr.mxu0 0.0
  %1268 = vmatpush1.msra.mxu0 0.0
  %1269 = vmatprep.subr.mxu0 0.0
  %1270 = vmatpush1.msra.mxu0 0.0
  %1271 = vmatprep.subr.mxu0 0.0
  %1272 = vmatpush1.msra.mxu0 0.0
  %1273 = vmatprep.subr.mxu0 0.0
  %1274 = vmatpush1.msra.mxu0 0.0
  %1275 = vmatprep.subr.mxu0 0.0
  %1276 = vmatpush1.msra.mxu0 0.0
  %1277 = vmatprep.subr.mxu0 0.0
  %1278 = vmatpush1.msra.mxu0 0.0
  %1279 = vmatprep.subr.mxu0 0.0
  %1280 = vmatpush1.msra.mxu0 0.0
  %1281 = vmatprep.subr.mxu0 0.0
  %1282 = vmatpush1.msra.mxu0 0.0
  %1283 = vmatprep.subr.mxu0 0.0
  %1284 = vmatpush1.msra.mxu0 0.0
  %1285 = vmatprep.subr.mxu0 0.0
  %1286 = vmatpush1.msra.mxu0 0.0
  %1287 = vmatprep.subr.mxu0 0.0
  %1288 = vmatpush1.msra.mxu0 0.0
  %1289 = vmatprep.subr.mxu0 0.0
  %1290 = vmatpush1.msra.mxu0 0.0
  %1291 = vmatprep.subr.mxu0 0.0
  %1292 = vmatpush1.msra.mxu0 0.0
  %1293 = vmatprep.subr.mxu0 0.0
  %1294 = vmatpush1.msra.mxu0 0.0
  %1295 = vmatprep.subr.mxu0 0.0
  %1296 = vmatpush1.msra.mxu0 0.0
  %1297 = vmatprep.subr.mxu0 0.0
  %1298 = vmatpush1.msra.mxu0 0.0
  %1299 = vmatprep.subr.mxu0 0.0
  %1300 = vmatpush1.msra.mxu0 0.0
  %1301 = vmatprep.subr.mxu0 0.0
  %1302 = vmatpush1.msra.mxu0 0.0
  %1303 = vmatprep.mubr.f32.mxu0 0.0
  %v1304 = vand.u32 %v427, 4294901760
  %v1305 = vsub.f32 %v427, %v1304
  %1306 = vmatmul.mubr.f32.gmra.mrb[0].mxu0 %v1305
  %v1307 = vpop.f32.mrb[0].mxu0
  %v1308 = vadd.f32 %v1215, %v1307
  %v1309 = vpop.f32.mrb[0].mxu0
  %v1310 = vadd.f32 %v1217, %v1309
  %1311 = vdwg.mxu0
  %v1312 = vand.u32 %v402, 4294901760
  %1313 = vmatprep.subr.mxu0 %v1312
  %v1314 = vand.u32 %v401, 4294901760
  %1315 = vmatpush1.msra.mxu0 %v1314
  %v1316 = vand.u32 %v406, 4294901760
  %1317 = vmatprep.subr.mxu0 %v1316
  %v1318 = vand.u32 %v405, 4294901760
  %1319 = vmatpush1.msra.mxu0 %v1318
  %v1320 = vand.u32 %v410, 4294901760
  %1321 = vmatprep.subr.mxu0 %v1320
  %v1322 = vand.u32 %v409, 4294901760
  %1323 = vmatpush1.msra.mxu0 %v1322
  %v1324 = vand.u32 %v414, 4294901760
  %1325 = vmatprep.subr.mxu0 %v1324
  %v1326 = vand.u32 %v413, 4294901760
  %1327 = vmatpush1.msra.mxu0 %v1326
  %v1328 = vand.u32 %v440, 4294901760
  %1329 = vmatprep.subr.mxu0 %v1328
  %v1330 = vand.u32 %v437, 4294901760
  %1331 = vmatpush1.msra.mxu0 %v1330
  %1332 = vmatprep.subr.mxu0 0.0
  %1333 = vmatpush1.msra.mxu0 0.0
  %1334 = vmatprep.subr.mxu0 0.0
  %1335 = vmatpush1.msra.mxu0 0.0
  %1336 = vmatprep.subr.mxu0 0.0
  %1337 = vmatpush1.msra.mxu0 0.0
  %1338 = vmatprep.subr.mxu0 0.0
  %1339 = vmatpush1.msra.mxu0 0.0
  %1340 = vmatprep.subr.mxu0 0.0
  %1341 = vmatpush1.msra.mxu0 0.0
  %1342 = vmatprep.subr.mxu0 0.0
  %1343 = vmatpush1.msra.mxu0 0.0
  %1344 = vmatprep.subr.mxu0 0.0
  %1345 = vmatpush1.msra.mxu0 0.0
  %1346 = vmatprep.subr.mxu0 0.0
  %1347 = vmatpush1.msra.mxu0 0.0
  %1348 = vmatprep.subr.mxu0 0.0
  %1349 = vmatpush1.msra.mxu0 0.0
  %1350 = vmatprep.subr.mxu0 0.0
  %1351 = vmatpush1.msra.mxu0 0.0
  %1352 = vmatprep.subr.mxu0 0.0
  %1353 = vmatpush1.msra.mxu0 0.0
  %1354 = vmatprep.subr.mxu0 0.0
  %1355 = vmatpush1.msra.mxu0 0.0
  %1356 = vmatprep.subr.mxu0 0.0
  %1357 = vmatpush1.msra.mxu0 0.0
  %1358 = vmatprep.subr.mxu0 0.0
  %1359 = vmatpush1.msra.mxu0 0.0
  %1360 = vmatprep.subr.mxu0 0.0
  %1361 = vmatpush1.msra.mxu0 0.0
  %1362 = vmatprep.subr.mxu0 0.0
  %1363 = vmatpush1.msra.mxu0 0.0
  %1364 = vmatprep.subr.mxu0 0.0
  %1365 = vmatpush1.msra.mxu0 0.0
  %1366 = vmatprep.subr.mxu0 0.0
  %1367 = vmatpush1.msra.mxu0 0.0
  %1368 = vmatprep.subr.mxu0 0.0
  %1369 = vmatpush1.msra.mxu0 0.0
  %1370 = vmatprep.subr.mxu0 0.0
  %1371 = vmatpush1.msra.mxu0 0.0
  %1372 = vmatprep.subr.mxu0 0.0
  %1373 = vmatpush1.msra.mxu0 0.0
  %1374 = vmatprep.subr.mxu0 0.0
  %1375 = vmatpush1.msra.mxu0 0.0
  %1376 = vmatprep.subr.mxu0 0.0
  %1377 = vmatpush1.msra.mxu0 0.0
  %1378 = vmatprep.subr.mxu0 0.0
  %1379 = vmatpush1.msra.mxu0 0.0
  %1380 = vmatprep.subr.mxu0 0.0
  %1381 = vmatpush1.msra.mxu0 0.0
  %1382 = vmatprep.subr.mxu0 0.0
  %1383 = vmatpush1.msra.mxu0 0.0
  %1384 = vmatprep.subr.mxu0 0.0
  %1385 = vmatpush1.msra.mxu0 0.0
  %1386 = vmatprep.mubr.f32.mxu0 0.0
  %v1387 = vand.u32 %v427, 4294901760
  %v1388 = vsub.f32 %v427, %v1387
  %v1389 = vand.u32 %v1388, 4294901760
  %1390 = vmatmul.mubr.f32.gmra.mrb[0].mxu0 %v1389
  %v1391 = vpop.f32.mrb[0].mxu0
  %v1392 = vadd.f32 %v1308, %v1391
  %v1393 = vpop.f32.mrb[0].mxu0
  %v1394 = vadd.f32 %v1310, %v1393
  %1395 = vdwg.mxu0
  %v1396 = vand.u32 %v402, 4294901760
  %v1397 = vsub.f32 %v402, %v1396
  %v1398 = vand.u32 %v1397, 4294901760
  %1399 = vmatprep.subr.mxu0 %v1398
  %v1400 = vand.u32 %v401, 4294901760
  %v1401 = vsub.f32 %v401, %v1400
  %v1402 = vand.u32 %v1401, 4294901760
  %1403 = vmatpush1.msra.mxu0 %v1402
  %v1404 = vand.u32 %v406, 4294901760
  %v1405 = vsub.f32 %v406, %v1404
  %v1406 = vand.u32 %v1405, 4294901760
  %1407 = vmatprep.subr.mxu0 %v1406
  %v1408 = vand.u32 %v405, 4294901760
  %v1409 = vsub.f32 %v405, %v1408
  %v1410 = vand.u32 %v1409, 4294901760
  %1411 = vmatpush1.msra.mxu0 %v1410
  %v1412 = vand.u32 %v410, 4294901760
  %v1413 = vsub.f32 %v410, %v1412
  %v1414 = vand.u32 %v1413, 4294901760
  %1415 = vmatprep.subr.mxu0 %v1414
  %v1416 = vand.u32 %v409, 4294901760
  %v1417 = vsub.f32 %v409, %v1416
  %v1418 = vand.u32 %v1417, 4294901760
  %1419 = vmatpush1.msra.mxu0 %v1418
  %v1420 = vand.u32 %v414, 4294901760
  %v1421 = vsub.f32 %v414, %v1420
  %v1422 = vand.u32 %v1421, 4294901760
  %1423 = vmatprep.subr.mxu0 %v1422
  %v1424 = vand.u32 %v413, 4294901760
  %v1425 = vsub.f32 %v413, %v1424
  %v1426 = vand.u32 %v1425, 4294901760
  %1427 = vmatpush1.msra.mxu0 %v1426
  %v1428 = vand.u32 %v440, 4294901760
  %v1429 = vsub.f32 %v440, %v1428
  %v1430 = vand.u32 %v1429, 4294901760
  %1431 = vmatprep.subr.mxu0 %v1430
  %v1432 = vand.u32 %v437, 4294901760
  %v1433 = vsub.f32 %v437, %v1432
  %v1434 = vand.u32 %v1433, 4294901760
  %1435 = vmatpush1.msra.mxu0 %v1434
  %1436 = vmatprep.subr.mxu0 0.0
  %1437 = vmatpush1.msra.mxu0 0.0
  %1438 = vmatprep.subr.mxu0 0.0
  %1439 = vmatpush1.msra.mxu0 0.0
  %1440 = vmatprep.subr.mxu0 0.0
  %1441 = vmatpush1.msra.mxu0 0.0
  %1442 = vmatprep.subr.mxu0 0.0
  %1443 = vmatpush1.msra.mxu0 0.0
  %1444 = vmatprep.subr.mxu0 0.0
  %1445 = vmatpush1.msra.mxu0 0.0
  %1446 = vmatprep.subr.mxu0 0.0
  %1447 = vmatpush1.msra.mxu0 0.0
  %1448 = vmatprep.subr.mxu0 0.0
  %1449 = vmatpush1.msra.mxu0 0.0
  %1450 = vmatprep.subr.mxu0 0.0
  %1451 = vmatpush1.msra.mxu0 0.0
  %1452 = vmatprep.subr.mxu0 0.0
  %1453 = vmatpush1.msra.mxu0 0.0
  %1454 = vmatprep.subr.mxu0 0.0
  %1455 = vmatpush1.msra.mxu0 0.0
  %1456 = vmatprep.subr.mxu0 0.0
  %1457 = vmatpush1.msra.mxu0 0.0
  %1458 = vmatprep.subr.mxu0 0.0
  %1459 = vmatpush1.msra.mxu0 0.0
  %1460 = vmatprep.subr.mxu0 0.0
  %1461 = vmatpush1.msra.mxu0 0.0
  %1462 = vmatprep.subr.mxu0 0.0
  %1463 = vmatpush1.msra.mxu0 0.0
  %1464 = vmatprep.subr.mxu0 0.0
  %1465 = vmatpush1.msra.mxu0 0.0
  %1466 = vmatprep.subr.mxu0 0.0
  %1467 = vmatpush1.msra.mxu0 0.0
  %1468 = vmatprep.subr.mxu0 0.0
  %1469 = vmatpush1.msra.mxu0 0.0
  %1470 = vmatprep.subr.mxu0 0.0
  %1471 = vmatpush1.msra.mxu0 0.0
  %1472 = vmatprep.subr.mxu0 0.0
  %1473 = vmatpush1.msra.mxu0 0.0
  %1474 = vmatprep.subr.mxu0 0.0
  %1475 = vmatpush1.msra.mxu0 0.0
  %1476 = vmatprep.subr.mxu0 0.0
  %1477 = vmatpush1.msra.mxu0 0.0
  %1478 = vmatprep.subr.mxu0 0.0
  %1479 = vmatpush1.msra.mxu0 0.0
  %1480 = vmatprep.subr.mxu0 0.0
  %1481 = vmatpush1.msra.mxu0 0.0
  %1482 = vmatprep.subr.mxu0 0.0
  %1483 = vmatpush1.msra.mxu0 0.0
  %1484 = vmatprep.subr.mxu0 0.0
  %1485 = vmatpush1.msra.mxu0 0.0
  %1486 = vmatprep.subr.mxu0 0.0
  %1487 = vmatpush1.msra.mxu0 0.0
  %1488 = vmatprep.subr.mxu0 0.0
  %1489 = vmatpush1.msra.mxu0 0.0
  %1490 = vmatprep.mubr.f32.mxu0 0.0
  %v1491 = vand.u32 %v427, 4294901760
  %1492 = vmatmul.mubr.f32.gmra.mrb[0].mxu0 %v1491
  %v1493 = vpop.f32.mrb[0].mxu0
  %v1494 = vadd.f32 %v1392, %v1493
  %v1495 = vpop.f32.mrb[0].mxu0
  %v1496 = vadd.f32 %v1394, %v1495
  %1497 = vdwg.mxu0
  %v1498 = vand.u32 %v402, 4294901760
  %1499 = vmatprep.subr.mxu0 %v1498
  %v1500 = vand.u32 %v401, 4294901760
  %1501 = vmatpush1.msra.mxu0 %v1500
  %v1502 = vand.u32 %v406, 4294901760
  %1503 = vmatprep.subr.mxu0 %v1502
  %v1504 = vand.u32 %v405, 4294901760
  %1505 = vmatpush1.msra.mxu0 %v1504
  %v1506 = vand.u32 %v410, 4294901760
  %1507 = vmatprep.subr.mxu0 %v1506
  %v1508 = vand.u32 %v409, 4294901760
  %1509 = vmatpush1.msra.mxu0 %v1508
  %v1510 = vand.u32 %v414, 4294901760
  %1511 = vmatprep.subr.mxu0 %v1510
  %v1512 = vand.u32 %v413, 4294901760
  %1513 = vmatpush1.msra.mxu0 %v1512
  %v1514 = vand.u32 %v440, 4294901760
  %1515 = vmatprep.subr.mxu0 %v1514
  %v1516 = vand.u32 %v437, 4294901760
  %1517 = vmatpush1.msra.mxu0 %v1516
  %1518 = vmatprep.subr.mxu0 0.0
  %1519 = vmatpush1.msra.mxu0 0.0
  %1520 = vmatprep.subr.mxu0 0.0
  %1521 = vmatpush1.msra.mxu0 0.0
  %1522 = vmatprep.subr.mxu0 0.0
  %1523 = vmatpush1.msra.mxu0 0.0
  %1524 = vmatprep.subr.mxu0 0.0
  %1525 = vmatpush1.msra.mxu0 0.0
  %1526 = vmatprep.subr.mxu0 0.0
  %1527 = vmatpush1.msra.mxu0 0.0
  %1528 = vmatprep.subr.mxu0 0.0
  %1529 = vmatpush1.msra.mxu0 0.0
  %1530 = vmatprep.subr.mxu0 0.0
  %1531 = vmatpush1.msra.mxu0 0.0
  %1532 = vmatprep.subr.mxu0 0.0
  %1533 = vmatpush1.msra.mxu0 0.0
  %1534 = vmatprep.subr.mxu0 0.0
  %1535 = vmatpush1.msra.mxu0 0.0
  %1536 = vmatprep.subr.mxu0 0.0
  %1537 = vmatpush1.msra.mxu0 0.0
  %1538 = vmatprep.subr.mxu0 0.0
  %1539 = vmatpush1.msra.mxu0 0.0
  %1540 = vmatprep.subr.mxu0 0.0
  %1541 = vmatpush1.msra.mxu0 0.0
  %1542 = vmatprep.subr.mxu0 0.0
  %1543 = vmatpush1.msra.mxu0 0.0
  %1544 = vmatprep.subr.mxu0 0.0
  %1545 = vmatpush1.msra.mxu0 0.0
  %1546 = vmatprep.subr.mxu0 0.0
  %1547 = vmatpush1.msra.mxu0 0.0
  %1548 = vmatprep.subr.mxu0 0.0
  %1549 = vmatpush1.msra.mxu0 0.0
  %1550 = vmatprep.subr.mxu0 0.0
  %1551 = vmatpush1.msra.mxu0 0.0
  %1552 = vmatprep.subr.mxu0 0.0
  %1553 = vmatpush1.msra.mxu0 0.0
  %1554 = vmatprep.subr.mxu0 0.0
  %1555 = vmatpush1.msra.mxu0 0.0
  %1556 = vmatprep.subr.mxu0 0.0
  %1557 = vmatpush1.msra.mxu0 0.0
  %1558 = vmatprep.subr.mxu0 0.0
  %1559 = vmatpush1.msra.mxu0 0.0
  %1560 = vmatprep.subr.mxu0 0.0
  %1561 = vmatpush1.msra.mxu0 0.0
  %1562 = vmatprep.subr.mxu0 0.0
  %1563 = vmatpush1.msra.mxu0 0.0
  %1564 = vmatprep.subr.mxu0 0.0
  %1565 = vmatpush1.msra.mxu0 0.0
  %1566 = vmatprep.subr.mxu0 0.0
  %1567 = vmatpush1.msra.mxu0 0.0
  %1568 = vmatprep.subr.mxu0 0.0
  %1569 = vmatpush1.msra.mxu0 0.0
  %1570 = vmatprep.subr.mxu0 0.0
  %1571 = vmatpush1.msra.mxu0 0.0
  %1572 = vmatprep.mubr.f32.mxu0 0.0
  %v1573 = vand.u32 %v427, 4294901760
  %1574 = vmatmul.mubr.f32.gmra.mrb[0].mxu0 %v1573
  %v1575 = vpop.f32.mrb[0].mxu0
  %v1576 = vadd.f32 %v1494, %v1575
  %v1577 = vpop.f32.mrb[0].mxu0
  %v1578 = vadd.f32 %v1496, %v1577
  %1579 = vdwg.mxu0
  %1580 = vst [vmem:[%s3] sm:$0xff] %v1007
  %1581 = vst [vmem:[%s3 + $0x8] sm:$0xff] %v1009
  %s1582 = scalar_lea.vmem %s3, 16
  %1583 = vst [vmem:[%s1582] sm:$0xff] %v1576
  %1584 = vst [vmem:[%s1582 + $0x8] sm:$0xff] %v1578
  // Predicated region
  $region14: #{conv2d_pallas.1} parent=0 // pred_check
    _
  $region15: #{conv2d_pallas.1} parent=0 // pred_check_branch
    %1586 = sbr.rel (0) target = $region17
  $region16: #{conv2d_pallas.1} parent=0 // pred_region
    _
  $region17: #{conv2d_pallas.1} parent=0 // pred_fallthru
    _
  // Predicated region
  $region18: #{conv2d_pallas.1} parent=0 // pred_check
    _
  $region19: #{conv2d_pallas.1} parent=0 // pred_check_branch
    %1588 = sbr.rel (0) target = $region21
  $region20: #{conv2d_pallas.1} parent=0 // pred_region
    _
  $region21: #{conv2d_pallas.1} parent=0 // pred_fallthru
    _

</llo_original>
